<compile_context>
chip_gen: v6e
topology: v6e:2x2x1
jax: 0.10.0
libtpu: 0.0.40
codegen_flags: <defaults>
</compile_context>

<pallas_src>
import jax
import jax.numpy as jnp
from jax.experimental import pallas as pl
from jax.experimental.pallas import tpu as pltpu


def residual_mlp_kernel(x_ref,
                        w1_ref, b1_ref,
                        w2_ref, b2_ref,
                        w3_ref, b3_ref,
                        w4_ref, b4_ref,
                        gamma_ref, beta_ref,
                        o_ref):
    # Keep all elementwise math in f32; bf16 only at the MXU inputs below.
    x = x_ref[...].astype(jnp.float32)                 # [TB, in_dim]
    in_dim = x_ref.shape[1]

    # fc1 + ReLU: K = in_dim is tiny -> VPU broadcast-MAC, not the MXU.
    w1 = w1_ref[...].astype(jnp.float32)               # [in_dim, H]
    h = b1_ref[...].astype(jnp.float32)                # [1, H] -> broadcasts
    for k in range(in_dim):                            # unrolled at trace time
        h = h + x[:, k:k + 1] * w1[k:k + 1, :]
    h = jnp.maximum(h, 0.0)

    # fc2 + ReLU: bf16 MXU matmul, f32 accumulate, f32 bias/ReLU.
    h = jnp.dot(h.astype(w2_ref.dtype), w2_ref[...],
                preferred_element_type=jnp.float32) + b2_ref[...]
    h = jnp.maximum(h, 0.0)

    # fc3 + ReLU: bf16 MXU matmul, f32 accumulate.
    h = jnp.dot(h.astype(w3_ref.dtype), w3_ref[...],
                preferred_element_type=jnp.float32) + b3_ref[...]
    h = jnp.maximum(h, 0.0)

    # fc4 (no activation). N = out_dim is tiny; keep f32 since the LayerNorm
    # over 2 elements is sign-sensitive.
    h4 = jnp.dot(h, w4_ref[...], preferred_element_type=jnp.float32) + b4_ref[...]

    # LayerNorm over the last axis, eps = 1e-5, biased variance (PyTorch).
    mean = jnp.mean(h4, axis=-1, keepdims=True)
    var = jnp.mean((h4 - mean) ** 2, axis=-1, keepdims=True)
    xn = (h4 - mean) * jax.lax.rsqrt(var + 1e-5)
    o_ref[...] = (xn * gamma_ref[...] + beta_ref[...]).astype(o_ref.dtype)


def residual_mlp(x, params, *, tb=None, matmul_dtype=jnp.bfloat16):
    (w1, b1, w2, b2, w3, b3, w4, b4, gamma, beta) = params
    B, in_dim = x.shape
    out_dim = w4.shape[1]

    # Batch tile: 256 matches the v6e/v7x 2x256x256 MXU; 128 also fills v5e's
    # 4x128x128 MXU. Must be a multiple of 8 (sublane granularity).
    if tb is None:
        tb = min(B, 256)
    tb = max(8, tb)
    pad = -B % tb
    if pad:
        x = jnp.pad(x, ((0, pad), (0, 0)))
    bp = B + pad
    grid = (bp // tb,)

    # Store the two hidden x hidden weights in bf16 in HBM: halves the weight
    # DMA (the dominant cost at small batch); f32 accumulation in-kernel.
    w2m = w2.astype(matmul_dtype)
    w3m = w3.astype(matmul_dtype)

    def resident(a):
        # Constant block index -> fetched once, stays VMEM-resident across
        # all batch tiles. (At 256x256 this is <0.2 MiB per weight; if the
        # layer is scaled up, re-budget VMEM for v7x's 64 MiB / raise
        # vmem_limit_bytes.)
        return pl.BlockSpec(a.shape, lambda i: tuple(0 for _ in a.shape))

    args = (x, w1, b1, w2m, b2, w3m, b3, w4, b4, gamma, beta)
    in_specs = [pl.BlockSpec((tb, in_dim), lambda i: (i, 0))]
    in_specs += [resident(a) for a in args[1:]]
    out_specs = pl.BlockSpec((tb, out_dim), lambda i: (i, 0))

    out = pl.pallas_call(
        residual_mlp_kernel,
        out_shape=jax.ShapeDtypeStruct((bp, out_dim), x.dtype),
        grid=grid,
        in_specs=in_specs,
        out_specs=out_specs,
        compiler_params=pltpu.CompilerParams(
            # Batch tiles are independent: pipeline their DMA against compute
            # and shard across both TensorCores on v7x.
            dimension_semantics=("parallel",)),
    )(*args)
    return out[:B] if pad else out


def init_params(key, input_dim=2, hidden_dim=256, output_dim=2):
    """Deterministic synthetic init (PyTorch-Linear-like uniform scaling)."""
    keys = jax.random.split(key, 8)

    def linear(kw, kb, fan_in, fan_out):
        bound = 1.0 / jnp.sqrt(fan_in)
        w = jax.random.uniform(kw, (fan_in, fan_out), jnp.float32, -bound, bound)
        b = jax.random.uniform(kb, (1, fan_out), jnp.float32, -bound, bound)
        return w, b

    w1, b1 = linear(keys[0], keys[1], input_dim, hidden_dim)
    w2, b2 = linear(keys[2], keys[3], hidden_dim, hidden_dim)
    w3, b3 = linear(keys[4], keys[5], hidden_dim, hidden_dim)
    w4, b4 = linear(keys[6], keys[7], hidden_dim, output_dim)
    gamma = jnp.ones((1, output_dim), jnp.float32)
    beta = jnp.zeros((1, output_dim), jnp.float32)
    return (w1, b1, w2, b2, w3, b3, w4, b4, gamma, beta)


def residual_mlp_ref(x, params, matmul_dtype=jnp.bfloat16):
    """Pure-JAX reference mirroring the kernel's numerics (bf16 at the two
    hidden matmul inputs, f32 everywhere else)."""
    (w1, b1, w2, b2, w3, b3, w4, b4, gamma, beta) = params
    h = jnp.maximum(x @ w1 + b1, 0.0)
    h = jnp.maximum(
        jnp.dot(h.astype(matmul_dtype), w2.astype(matmul_dtype),
                preferred_element_type=jnp.float32) + b2, 0.0)
    h = jnp.maximum(
        jnp.dot(h.astype(matmul_dtype), w3.astype(matmul_dtype),
                preferred_element_type=jnp.float32) + b3, 0.0)
    h = jnp.dot(h, w4, preferred_element_type=jnp.float32) + b4
    mean = jnp.mean(h, axis=-1, keepdims=True)
    var = jnp.mean((h - mean) ** 2, axis=-1, keepdims=True)
    return (h - mean) * jax.lax.rsqrt(var + 1e-5) * gamma + beta


if __name__ == "__main__":
    key = jax.random.PRNGKey(0)
    k_param, k_x = jax.random.split(key)

    input_dim, hidden_dim, output_dim = 2, 256, 2
    batch = 256  # two batch tiles of 128 -> pipelined / megacore-shardable

    params = init_params(k_param, input_dim, hidden_dim, output_dim)
    x = jax.random.normal(k_x, (batch, input_dim), jnp.float32)

    out = residual_mlp(x, params, tb=128)
    out = jax.block_until_ready(out)

    ref = residual_mlp_ref(x, params)
    assert out.shape == (batch, output_dim)
    max_err = float(jnp.max(jnp.abs(out - ref)))
    assert jnp.allclose(out, ref, atol=2e-2, rtol=2e-2), f"max_err={max_err}"

    print("KERNEL_OK")
</pallas_src>

<mosaic_0001>
module attributes {stable_mosaic.version = 11 : i64} {
  func.func @residual_mlp_kernel(%arg0: i32, %arg1: memref<128x2xf32, #tpu.memory_space<vmem>>, %arg2: memref<2x256xf32, #tpu.memory_space<vmem>>, %arg3: memref<1x256xf32, #tpu.memory_space<vmem>>, %arg4: memref<256x256xbf16, #tpu.memory_space<vmem>>, %arg5: memref<1x256xf32, #tpu.memory_space<vmem>>, %arg6: memref<256x256xbf16, #tpu.memory_space<vmem>>, %arg7: memref<1x256xf32, #tpu.memory_space<vmem>>, %arg8: memref<256x2xf32, #tpu.memory_space<vmem>>, %arg9: memref<1x2xf32, #tpu.memory_space<vmem>>, %arg10: memref<1x2xf32, #tpu.memory_space<vmem>>, %arg11: memref<1x2xf32, #tpu.memory_space<vmem>>, %arg12: memref<128x2xf32, #tpu.memory_space<vmem>>) attributes {dimension_semantics = [#tpu.dimension_semantics<parallel>], iteration_bounds = array<i64: 2>, scalar_prefetch = 0 : i64, scratch_operands = 0 : i64, tpu.core_type = #tpu.core_type<tc>, window_params = [{transform_indices = @transform_0, window_bounds = array<i64: 128, 2>}, {pipeline_mode = #tpu.pipeline_mode<synchronous>, transform_indices = @transform_1, window_bounds = array<i64: 2, 256>}, {pipeline_mode = #tpu.pipeline_mode<synchronous>, transform_indices = @transform_2, window_bounds = array<i64: 1, 256>}, {pipeline_mode = #tpu.pipeline_mode<synchronous>, transform_indices = @transform_3, window_bounds = array<i64: 256, 256>}, {pipeline_mode = #tpu.pipeline_mode<synchronous>, transform_indices = @transform_4, window_bounds = array<i64: 1, 256>}, {pipeline_mode = #tpu.pipeline_mode<synchronous>, transform_indices = @transform_5, window_bounds = array<i64: 256, 256>}, {pipeline_mode = #tpu.pipeline_mode<synchronous>, transform_indices = @transform_6, window_bounds = array<i64: 1, 256>}, {pipeline_mode = #tpu.pipeline_mode<synchronous>, transform_indices = @transform_7, window_bounds = array<i64: 256, 2>}, {pipeline_mode = #tpu.pipeline_mode<synchronous>, transform_indices = @transform_8, window_bounds = array<i64: 1, 2>}, {pipeline_mode = #tpu.pipeline_mode<synchronous>, transform_indices = @transform_9, window_bounds = array<i64: 1, 2>}, {pipeline_mode = #tpu.pipeline_mode<synchronous>, transform_indices = @transform_10, window_bounds = array<i64: 1, 2>}, {transform_indices = @transform_11, window_bounds = array<i64: 128, 2>}]} {
    %c0 = arith.constant 0 : index
    %c0_0 = arith.constant 0 : index
    %0 = vector.load %arg1[%c0, %c0_0] : memref<128x2xf32, #tpu.memory_space<vmem>>, vector<128x2xf32>
    %c0_1 = arith.constant 0 : index
    %c0_2 = arith.constant 0 : index
    %1 = vector.load %arg2[%c0_1, %c0_2] : memref<2x256xf32, #tpu.memory_space<vmem>>, vector<2x256xf32>
    %c0_3 = arith.constant 0 : index
    %c0_4 = arith.constant 0 : index
    %2 = vector.load %arg3[%c0_3, %c0_4] : memref<1x256xf32, #tpu.memory_space<vmem>>, vector<1x256xf32>
    %3 = vector.extract_strided_slice %0 {offsets = [0, 0], sizes = [128, 1], strides = [1, 1]} : vector<128x2xf32> to vector<128x1xf32>
    %4 = vector.extract_strided_slice %1 {offsets = [0, 0], sizes = [1, 256], strides = [1, 1]} : vector<2x256xf32> to vector<1x256xf32>
    %5 = vector.broadcast %3 : vector<128x1xf32> to vector<128x256xf32>
    %6 = vector.broadcast %4 : vector<1x256xf32> to vector<128x256xf32>
    %7 = arith.mulf %5, %6 : vector<128x256xf32>
    %8 = vector.broadcast %2 : vector<1x256xf32> to vector<128x256xf32>
    %9 = arith.addf %8, %7 : vector<128x256xf32>
    %10 = vector.extract_strided_slice %0 {offsets = [0, 1], sizes = [128, 1], strides = [1, 1]} : vector<128x2xf32> to vector<128x1xf32>
    %11 = vector.extract_strided_slice %1 {offsets = [1, 0], sizes = [1, 256], strides = [1, 1]} : vector<2x256xf32> to vector<1x256xf32>
    %12 = vector.broadcast %10 : vector<128x1xf32> to vector<128x256xf32>
    %13 = vector.broadcast %11 : vector<1x256xf32> to vector<128x256xf32>
    %14 = arith.mulf %12, %13 : vector<128x256xf32>
    %15 = arith.addf %9, %14 : vector<128x256xf32>
    %cst = arith.constant 0.000000e+00 : f32
    %16 = vector.broadcast %cst : f32 to vector<128x256xf32>
    %17 = arith.maximumf %15, %16 : vector<128x256xf32>
    %18 = arith.truncf %17 : vector<128x256xf32> to vector<128x256xbf16>
    %c0_5 = arith.constant 0 : index
    %c0_6 = arith.constant 0 : index
    %19 = vector.load %arg4[%c0_5, %c0_6] : memref<256x256xbf16, #tpu.memory_space<vmem>>, vector<256x256xbf16>
    %cst_7 = arith.constant dense<0.000000e+00> : vector<128x256xf32>
    %20 = tpu.matmul %18, %19, %cst_7 {dimension_numbers = #tpu.dot_dimension_numbers<[1], [0], [0], [1], [0, 0, 1, 1], [], []>} : vector<128x256xbf16>, vector<256x256xbf16>, vector<128x256xf32> -> vector<128x256xf32>
    %c0_8 = arith.constant 0 : index
    %c0_9 = arith.constant 0 : index
    %21 = vector.load %arg5[%c0_8, %c0_9] : memref<1x256xf32, #tpu.memory_space<vmem>>, vector<1x256xf32>
    %22 = vector.broadcast %21 : vector<1x256xf32> to vector<128x256xf32>
    %23 = arith.addf %20, %22 : vector<128x256xf32>
    %cst_10 = arith.constant 0.000000e+00 : f32
    %24 = vector.broadcast %cst_10 : f32 to vector<128x256xf32>
    %25 = arith.maximumf %23, %24 : vector<128x256xf32>
    %26 = arith.truncf %25 : vector<128x256xf32> to vector<128x256xbf16>
    %c0_11 = arith.constant 0 : index
    %c0_12 = arith.constant 0 : index
    %27 = vector.load %arg6[%c0_11, %c0_12] : memref<256x256xbf16, #tpu.memory_space<vmem>>, vector<256x256xbf16>
    %cst_13 = arith.constant dense<0.000000e+00> : vector<128x256xf32>
    %28 = tpu.matmul %26, %27, %cst_13 {dimension_numbers = #tpu.dot_dimension_numbers<[1], [0], [0], [1], [0, 0, 1, 1], [], []>} : vector<128x256xbf16>, vector<256x256xbf16>, vector<128x256xf32> -> vector<128x256xf32>
    %c0_14 = arith.constant 0 : index
    %c0_15 = arith.constant 0 : index
    %29 = vector.load %arg7[%c0_14, %c0_15] : memref<1x256xf32, #tpu.memory_space<vmem>>, vector<1x256xf32>
    %30 = vector.broadcast %29 : vector<1x256xf32> to vector<128x256xf32>
    %31 = arith.addf %28, %30 : vector<128x256xf32>
    %cst_16 = arith.constant 0.000000e+00 : f32
    %32 = vector.broadcast %cst_16 : f32 to vector<128x256xf32>
    %33 = arith.maximumf %31, %32 : vector<128x256xf32>
    %c0_17 = arith.constant 0 : index
    %c0_18 = arith.constant 0 : index
    %34 = vector.load %arg8[%c0_17, %c0_18] : memref<256x2xf32, #tpu.memory_space<vmem>>, vector<256x2xf32>
    %cst_19 = arith.constant dense<0.000000e+00> : vector<128x2xf32>
    %35 = tpu.matmul %33, %34, %cst_19 {dimension_numbers = #tpu.dot_dimension_numbers<[1], [0], [0], [1], [0, 0, 1, 1], [], []>} : vector<128x256xf32>, vector<256x2xf32>, vector<128x2xf32> -> vector<128x2xf32>
    %c0_20 = arith.constant 0 : index
    %c0_21 = arith.constant 0 : index
    %36 = vector.load %arg9[%c0_20, %c0_21] : memref<1x2xf32, #tpu.memory_space<vmem>>, vector<1x2xf32>
    %37 = vector.broadcast %36 : vector<1x2xf32> to vector<128x2xf32>
    %38 = arith.addf %35, %37 : vector<128x2xf32>
    %cst_22 = arith.constant dense<0.000000e+00> : vector<128xf32>
    %39 = vector.multi_reduction <add>, %38, %cst_22 [1] : vector<128x2xf32> to vector<128xf32>
    %40 = vector.shape_cast %39 : vector<128xf32> to vector<128x1xf32>
    %cst_23 = arith.constant 2.000000e+00 : f32
    %41 = vector.broadcast %cst_23 : f32 to vector<128x1xf32>
    %42 = arith.divf %40, %41 : vector<128x1xf32>
    %43 = vector.broadcast %42 : vector<128x1xf32> to vector<128x2xf32>
    %44 = arith.subf %38, %43 : vector<128x2xf32>
    %45 = arith.mulf %44, %44 : vector<128x2xf32>
    %cst_24 = arith.constant dense<0.000000e+00> : vector<128xf32>
    %46 = vector.multi_reduction <add>, %45, %cst_24 [1] : vector<128x2xf32> to vector<128xf32>
    %47 = vector.shape_cast %46 : vector<128xf32> to vector<128x1xf32>
    %cst_25 = arith.constant 2.000000e+00 : f32
    %48 = vector.broadcast %cst_25 : f32 to vector<128x1xf32>
    %49 = arith.divf %47, %48 : vector<128x1xf32>
    %50 = vector.broadcast %42 : vector<128x1xf32> to vector<128x2xf32>
    %51 = arith.subf %38, %50 : vector<128x2xf32>
    %cst_26 = arith.constant 9.99999974E-6 : f32
    %52 = vector.broadcast %cst_26 : f32 to vector<128x1xf32>
    %53 = arith.addf %49, %52 : vector<128x1xf32>
    %54 = math.rsqrt %53 : vector<128x1xf32>
    %55 = vector.broadcast %54 : vector<128x1xf32> to vector<128x2xf32>
    %56 = arith.mulf %51, %55 : vector<128x2xf32>
    %c0_27 = arith.constant 0 : index
    %c0_28 = arith.constant 0 : index
    %57 = vector.load %arg10[%c0_27, %c0_28] : memref<1x2xf32, #tpu.memory_space<vmem>>, vector<1x2xf32>
    %58 = vector.broadcast %57 : vector<1x2xf32> to vector<128x2xf32>
    %59 = arith.mulf %56, %58 : vector<128x2xf32>
    %c0_29 = arith.constant 0 : index
    %c0_30 = arith.constant 0 : index
    %60 = vector.load %arg11[%c0_29, %c0_30] : memref<1x2xf32, #tpu.memory_space<vmem>>, vector<1x2xf32>
    %61 = vector.broadcast %60 : vector<1x2xf32> to vector<128x2xf32>
    %62 = arith.addf %59, %61 : vector<128x2xf32>
    %c0_31 = arith.constant 0 : index
    %c0_32 = arith.constant 0 : index
    %63 = vector.load %arg12[%c0_31, %c0_32] : memref<128x2xf32, #tpu.memory_space<vmem>>, vector<128x2xf32>
    tpu.vector_store %arg12[%c0_31, %c0_32], %62 {strides = array<i32>} : memref<128x2xf32, #tpu.memory_space<vmem>>, vector<128x2xf32>,
    return
  }
  func.func @transform_0(%arg0: i32) -> (i32, i32) {
    %c0_i32 = arith.constant 0 : i32
    %c0_i32_0 = arith.constant 0 : i32
    return %arg0, %c0_i32 : i32, i32
  }
  func.func @transform_1(%arg0: i32) -> (i32, i32) {
    %c0_i32 = arith.constant 0 : i32
    %c0_i32_0 = arith.constant 0 : i32
    %c0_i32_1 = arith.constant 0 : i32
    return %c0_i32, %c0_i32_0 : i32, i32
  }
  func.func @transform_2(%arg0: i32) -> (i32, i32) {
    %c0_i32 = arith.constant 0 : i32
    %c0_i32_0 = arith.constant 0 : i32
    %c0_i32_1 = arith.constant 0 : i32
    return %c0_i32, %c0_i32_0 : i32, i32
  }
  func.func @transform_3(%arg0: i32) -> (i32, i32) {
    %c0_i32 = arith.constant 0 : i32
    %c0_i32_0 = arith.constant 0 : i32
    %c0_i32_1 = arith.constant 0 : i32
    return %c0_i32, %c0_i32_0 : i32, i32
  }
  func.func @transform_4(%arg0: i32) -> (i32, i32) {
    %c0_i32 = arith.constant 0 : i32
    %c0_i32_0 = arith.constant 0 : i32
    %c0_i32_1 = arith.constant 0 : i32
    return %c0_i32, %c0_i32_0 : i32, i32
  }
  func.func @transform_5(%arg0: i32) -> (i32, i32) {
    %c0_i32 = arith.constant 0 : i32
    %c0_i32_0 = arith.constant 0 : i32
    %c0_i32_1 = arith.constant 0 : i32
    return %c0_i32, %c0_i32_0 : i32, i32
  }
  func.func @transform_6(%arg0: i32) -> (i32, i32) {
    %c0_i32 = arith.constant 0 : i32
    %c0_i32_0 = arith.constant 0 : i32
    %c0_i32_1 = arith.constant 0 : i32
    return %c0_i32, %c0_i32_0 : i32, i32
  }
  func.func @transform_7(%arg0: i32) -> (i32, i32) {
    %c0_i32 = arith.constant 0 : i32
    %c0_i32_0 = arith.constant 0 : i32
    %c0_i32_1 = arith.constant 0 : i32
    return %c0_i32, %c0_i32_0 : i32, i32
  }
  func.func @transform_8(%arg0: i32) -> (i32, i32) {
    %c0_i32 = arith.constant 0 : i32
    %c0_i32_0 = arith.constant 0 : i32
    %c0_i32_1 = arith.constant 0 : i32
    return %c0_i32, %c0_i32_0 : i32, i32
  }
  func.func @transform_9(%arg0: i32) -> (i32, i32) {
    %c0_i32 = arith.constant 0 : i32
    %c0_i32_0 = arith.constant 0 : i32
    %c0_i32_1 = arith.constant 0 : i32
    return %c0_i32, %c0_i32_0 : i32, i32
  }
  func.func @transform_10(%arg0: i32) -> (i32, i32) {
    %c0_i32 = arith.constant 0 : i32
    %c0_i32_0 = arith.constant 0 : i32
    %c0_i32_1 = arith.constant 0 : i32
    return %c0_i32, %c0_i32_0 : i32, i32
  }
  func.func @transform_11(%arg0: i32) -> (i32, i32) {
    %c0_i32 = arith.constant 0 : i32
    %c0_i32_0 = arith.constant 0 : i32
    return %arg0, %c0_i32 : i32, i32
  }
}

</mosaic_0001>

<llo_original>
// kernel: tpu_custom_call.1
$region0: #{tpu_custom_call.1}
  #allocation0 [shape = 'u32[]', space=smem, size = 0x4, offset = 0x4, fixed_abs, tag = 'smem constant byte address 0x4 - core index']
  #allocation1 [shape = 'u32[144,128]{1,0:T(1,128)}', space=vmem, size = 0x12000, scoped, tag = 'internal scratch']
  %s0 = inlined_call_operand.vmem [shape: f32[256,2], index: 0, kind: input, shape index: {}]
  %s1 = inlined_call_operand.vmem [shape: f32[2,256], index: 1, kind: input, shape index: {}]
  %s2 = inlined_call_operand.vmem [shape: f32[1,256], index: 2, kind: input, shape index: {}]
  %s3 = inlined_call_operand.vmem [shape: bf16[256,256], index: 3, kind: input, shape index: {}]
  %s4 = inlined_call_operand.vmem [shape: f32[1,256], index: 4, kind: input, shape index: {}]
  %s5 = inlined_call_operand.vmem [shape: bf16[256,256], index: 5, kind: input, shape index: {}]
  %s6 = inlined_call_operand.vmem [shape: f32[1,256], index: 6, kind: input, shape index: {}]
  %s7 = inlined_call_operand.vmem [shape: f32[256,2], index: 7, kind: input, shape index: {}]
  %s8 = inlined_call_operand.vmem [shape: f32[1,2], index: 8, kind: input, shape index: {}]
  %s9 = inlined_call_operand.vmem [shape: f32[1,2], index: 9, kind: input, shape index: {}]
  %s10 = inlined_call_operand.vmem [shape: f32[1,2], index: 10, kind: input, shape index: {}]
  %s11 = inlined_call_operand.vmem [shape: f32[256,2], index: 11, kind: output, shape index: {}]
  %s12 = sld [smem:[#allocation0]]
  $region77: #{tpu_custom_call.1} parent=0
    _
  %s14 = ssub.s32 1, %s12
  %s15 = scalar_select 0, %s14, %s12
  loop: start=0, step=1, limit=4
  $region2: #{tpu_custom_call.1} parent=0 // loop_pre_header
    _
  $region3: #{tpu_custom_call.1} parent=0 // loop_header
    %s17 = sphi 0, %s21
    %p18 = scmp.ge.s32.totalorder %s17, 4
    %s27 = sphi 0, %s29
    %s30 = sphi 0, %s27
    %s31 = sphi 0, %s30
    %s47 = sphi 0, %s31
    %s51 = sphi 0, %s51
    %s53 = sphi 0, %s51
    %s54 = sphi 0, %s53
    %s68 = sphi 0, %s54
    %s72 = sphi 0, %s72
    %s74 = sphi 0, %s72
    %s75 = sphi 0, %s74
    %s89 = sphi 0, %s75
    %s93 = sphi 0, %s93
    %s95 = sphi 0, %s93
    %s96 = sphi 0, %s95
    %s110 = sphi 0, %s96
    %s114 = sphi 0, %s114
    %s116 = sphi 0, %s114
    %s117 = sphi 0, %s116
    %s131 = sphi 0, %s117
    %s135 = sphi 0, %s135
    %s137 = sphi 0, %s135
    %s138 = sphi 0, %s137
    %s152 = sphi 0, %s138
    %s156 = sphi 0, %s156
    %s158 = sphi 0, %s156
    %s159 = sphi 0, %s158
    %s173 = sphi 0, %s159
    %s177 = sphi 0, %s177
    %s179 = sphi 0, %s177
    %s180 = sphi 0, %s179
    %s194 = sphi 0, %s180
    %s198 = sphi 0, %s198
    %s200 = sphi 0, %s198
    %s201 = sphi 0, %s200
    %s215 = sphi 0, %s201
    %s219 = sphi 0, %s219
    %s221 = sphi 0, %s219
    %s222 = sphi 0, %s221
    %s236 = sphi 0, %s222
    %s240 = sphi 0, %s240
    %s242 = sphi 0, %s240
    %s243 = sphi 0, %s242
    %s257 = sphi 0, %s243
    %s263 = sphi 0, %s265
    %s266 = sphi 0, %s263
    %s267 = sphi 0, %s266
    %s283 = sphi 0, %s267
  $region4: #{tpu_custom_call.1} parent=0 // loop_header_branch
    %20 = sbr.rel (%p18) target = $region8
  $region5: #{tpu_custom_call.1} parent=0 // loop_body
    %s22 = ssub.s32 %s17, 1
    %s23 = ssub.s32 %s17, 2
    %s24 = sadd.s32 %s17, 1
    %s25 = ssub.s32 %s17, %s24
    %p26 = scmp.eq.s32.totalorder %s25, 0
    %s28 = sadd.s32 %s27, 1
    %s29 = scalar_select %p26, %s27, %s28
    %p32 = pneg %p26
    %p33 = scmp.eq.s32.totalorder %s17, 1
    %p34 = por %p32, %p33
    %p35 = scmp.ne.s32.totalorder %s27, %s30
    %p36 = scmp.eq.s32.totalorder %s17, 0
    %p37 = por %p35, %p36
    %p38 = scmp.ne.s32.totalorder %s27, %s30
    %p39 = scmp.eq.s32.totalorder %s22, 1
    %p40 = por %p38, %p39
    %p41 = scmp.ne.s32.totalorder %s30, %s31
    %p42 = scmp.eq.s32.totalorder %s22, 0
    %p43 = por %p41, %p42
    %p44 = scmp.ne.s32.totalorder %s30, %s31
    %p45 = scmp.eq.s32.totalorder %s23, 1
    %p46 = por %p44, %p45
    %p48 = scmp.ne.s32.totalorder %s31, %s47
    %p49 = scmp.eq.s32.totalorder %s23, 0
    %p50 = por %p48, %p49
    %s52 = sadd.s32 %s51, 1
    %p55 = scmp.eq.s32.totalorder %s17, 1
    %p56 = scmp.ne.s32.totalorder %s51, %s53
    %p57 = scmp.eq.s32.totalorder %s17, 0
    %p58 = por %p56, %p57
    %p59 = scmp.ne.s32.totalorder %s51, %s53
    %p60 = scmp.eq.s32.totalorder %s22, 1
    %p61 = por %p59, %p60
    %p62 = scmp.ne.s32.totalorder %s53, %s54
    %p63 = scmp.eq.s32.totalorder %s22, 0
    %p64 = por %p62, %p63
    %p65 = scmp.ne.s32.totalorder %s53, %s54
    %p66 = scmp.eq.s32.totalorder %s23, 1
    %p67 = por %p65, %p66
    %p69 = scmp.ne.s32.totalorder %s54, %s68
    %p70 = scmp.eq.s32.totalorder %s23, 0
    %p71 = por %p69, %p70
    %s73 = sadd.s32 %s72, 1
    %p76 = scmp.eq.s32.totalorder %s17, 1
    %p77 = scmp.ne.s32.totalorder %s72, %s74
    %p78 = scmp.eq.s32.totalorder %s17, 0
    %p79 = por %p77, %p78
    %p80 = scmp.ne.s32.totalorder %s72, %s74
    %p81 = scmp.eq.s32.totalorder %s22, 1
    %p82 = por %p80, %p81
    %p83 = scmp.ne.s32.totalorder %s74, %s75
    %p84 = scmp.eq.s32.totalorder %s22, 0
    %p85 = por %p83, %p84
    %p86 = scmp.ne.s32.totalorder %s74, %s75
    %p87 = scmp.eq.s32.totalorder %s23, 1
    %p88 = por %p86, %p87
    %p90 = scmp.ne.s32.totalorder %s75, %s89
    %p91 = scmp.eq.s32.totalorder %s23, 0
    %p92 = por %p90, %p91
    %s94 = sadd.s32 %s93, 1
    %p97 = scmp.eq.s32.totalorder %s17, 1
    %p98 = scmp.ne.s32.totalorder %s93, %s95
    %p99 = scmp.eq.s32.totalorder %s17, 0
    %p100 = por %p98, %p99
    %p101 = scmp.ne.s32.totalorder %s93, %s95
    %p102 = scmp.eq.s32.totalorder %s22, 1
    %p103 = por %p101, %p102
    %p104 = scmp.ne.s32.totalorder %s95, %s96
    %p105 = scmp.eq.s32.totalorder %s22, 0
    %p106 = por %p104, %p105
    %p107 = scmp.ne.s32.totalorder %s95, %s96
    %p108 = scmp.eq.s32.totalorder %s23, 1
    %p109 = por %p107, %p108
    %p111 = scmp.ne.s32.totalorder %s96, %s110
    %p112 = scmp.eq.s32.totalorder %s23, 0
    %p113 = por %p111, %p112
    %s115 = sadd.s32 %s114, 1
    %p118 = scmp.eq.s32.totalorder %s17, 1
    %p119 = scmp.ne.s32.totalorder %s114, %s116
    %p120 = scmp.eq.s32.totalorder %s17, 0
    %p121 = por %p119, %p120
    %p122 = scmp.ne.s32.totalorder %s114, %s116
    %p123 = scmp.eq.s32.totalorder %s22, 1
    %p124 = por %p122, %p123
    %p125 = scmp.ne.s32.totalorder %s116, %s117
    %p126 = scmp.eq.s32.totalorder %s22, 0
    %p127 = por %p125, %p126
    %p128 = scmp.ne.s32.totalorder %s116, %s117
    %p129 = scmp.eq.s32.totalorder %s23, 1
    %p130 = por %p128, %p129
    %p132 = scmp.ne.s32.totalorder %s117, %s131
    %p133 = scmp.eq.s32.totalorder %s23, 0
    %p134 = por %p132, %p133
    %s136 = sadd.s32 %s135, 1
    %p139 = scmp.eq.s32.totalorder %s17, 1
    %p140 = scmp.ne.s32.totalorder %s135, %s137
    %p141 = scmp.eq.s32.totalorder %s17, 0
    %p142 = por %p140, %p141
    %p143 = scmp.ne.s32.totalorder %s135, %s137
    %p144 = scmp.eq.s32.totalorder %s22, 1
    %p145 = por %p143, %p144
    %p146 = scmp.ne.s32.totalorder %s137, %s138
    %p147 = scmp.eq.s32.totalorder %s22, 0
    %p148 = por %p146, %p147
    %p149 = scmp.ne.s32.totalorder %s137, %s138
    %p150 = scmp.eq.s32.totalorder %s23, 1
    %p151 = por %p149, %p150
    %p153 = scmp.ne.s32.totalorder %s138, %s152
    %p154 = scmp.eq.s32.totalorder %s23, 0
    %p155 = por %p153, %p154
    %s157 = sadd.s32 %s156, 1
    %p160 = scmp.eq.s32.totalorder %s17, 1
    %p161 = scmp.ne.s32.totalorder %s156, %s158
    %p162 = scmp.eq.s32.totalorder %s17, 0
    %p163 = por %p161, %p162
    %p164 = scmp.ne.s32.totalorder %s156, %s158
    %p165 = scmp.eq.s32.totalorder %s22, 1
    %p166 = por %p164, %p165
    %p167 = scmp.ne.s32.totalorder %s158, %s159
    %p168 = scmp.eq.s32.totalorder %s22, 0
    %p169 = por %p167, %p168
    %p170 = scmp.ne.s32.totalorder %s158, %s159
    %p171 = scmp.eq.s32.totalorder %s23, 1
    %p172 = por %p170, %p171
    %p174 = scmp.ne.s32.totalorder %s159, %s173
    %p175 = scmp.eq.s32.totalorder %s23, 0
    %p176 = por %p174, %p175
    %s178 = sadd.s32 %s177, 1
    %p181 = scmp.eq.s32.totalorder %s17, 1
    %p182 = scmp.ne.s32.totalorder %s177, %s179
    %p183 = scmp.eq.s32.totalorder %s17, 0
    %p184 = por %p182, %p183
    %p185 = scmp.ne.s32.totalorder %s177, %s179
    %p186 = scmp.eq.s32.totalorder %s22, 1
    %p187 = por %p185, %p186
    %p188 = scmp.ne.s32.totalorder %s179, %s180
    %p189 = scmp.eq.s32.totalorder %s22, 0
    %p190 = por %p188, %p189
    %p191 = scmp.ne.s32.totalorder %s179, %s180
    %p192 = scmp.eq.s32.totalorder %s23, 1
    %p193 = por %p191, %p192
    %p195 = scmp.ne.s32.totalorder %s180, %s194
    %p196 = scmp.eq.s32.totalorder %s23, 0
    %p197 = por %p195, %p196
    %s199 = sadd.s32 %s198, 1
    %p202 = scmp.eq.s32.totalorder %s17, 1
    %p203 = scmp.ne.s32.totalorder %s198, %s200
    %p204 = scmp.eq.s32.totalorder %s17, 0
    %p205 = por %p203, %p204
    %p206 = scmp.ne.s32.totalorder %s198, %s200
    %p207 = scmp.eq.s32.totalorder %s22, 1
    %p208 = por %p206, %p207
    %p209 = scmp.ne.s32.totalorder %s200, %s201
    %p210 = scmp.eq.s32.totalorder %s22, 0
    %p211 = por %p209, %p210
    %p212 = scmp.ne.s32.totalorder %s200, %s201
    %p213 = scmp.eq.s32.totalorder %s23, 1
    %p214 = por %p212, %p213
    %p216 = scmp.ne.s32.totalorder %s201, %s215
    %p217 = scmp.eq.s32.totalorder %s23, 0
    %p218 = por %p216, %p217
    %s220 = sadd.s32 %s219, 1
    %p223 = scmp.eq.s32.totalorder %s17, 1
    %p224 = scmp.ne.s32.totalorder %s219, %s221
    %p225 = scmp.eq.s32.totalorder %s17, 0
    %p226 = por %p224, %p225
    %p227 = scmp.ne.s32.totalorder %s219, %s221
    %p228 = scmp.eq.s32.totalorder %s22, 1
    %p229 = por %p227, %p228
    %p230 = scmp.ne.s32.totalorder %s221, %s222
    %p231 = scmp.eq.s32.totalorder %s22, 0
    %p232 = por %p230, %p231
    %p233 = scmp.ne.s32.totalorder %s221, %s222
    %p234 = scmp.eq.s32.totalorder %s23, 1
    %p235 = por %p233, %p234
    %p237 = scmp.ne.s32.totalorder %s222, %s236
    %p238 = scmp.eq.s32.totalorder %s23, 0
    %p239 = por %p237, %p238
    %s241 = sadd.s32 %s240, 1
    %p244 = scmp.eq.s32.totalorder %s17, 1
    %p245 = scmp.ne.s32.totalorder %s240, %s242
    %p246 = scmp.eq.s32.totalorder %s17, 0
    %p247 = por %p245, %p246
    %p248 = scmp.ne.s32.totalorder %s240, %s242
    %p249 = scmp.eq.s32.totalorder %s22, 1
    %p250 = por %p248, %p249
    %p251 = scmp.ne.s32.totalorder %s242, %s243
    %p252 = scmp.eq.s32.totalorder %s22, 0
    %p253 = por %p251, %p252
    %p254 = scmp.ne.s32.totalorder %s242, %s243
    %p255 = scmp.eq.s32.totalorder %s23, 1
    %p256 = por %p254, %p255
    %p258 = scmp.ne.s32.totalorder %s243, %s257
    %p259 = scmp.eq.s32.totalorder %s23, 0
    %p260 = por %p258, %p259
    %s261 = ssub.s32 %s17, %s24
    %p262 = scmp.eq.s32.totalorder %s261, 0
    %s264 = sadd.s32 %s263, 1
    %s265 = scalar_select %p262, %s263, %s264
    %p268 = pneg %p262
    %p269 = scmp.eq.s32.totalorder %s17, 1
    %p270 = por %p268, %p269
    %p271 = scmp.ne.s32.totalorder %s263, %s266
    %p272 = scmp.eq.s32.totalorder %s17, 0
    %p273 = por %p271, %p272
    %p274 = scmp.ne.s32.totalorder %s263, %s266
    %p275 = scmp.eq.s32.totalorder %s22, 1
    %p276 = por %p274, %p275
    %p277 = scmp.ne.s32.totalorder %s266, %s267
    %p278 = scmp.eq.s32.totalorder %s22, 0
    %p279 = por %p277, %p278
    %p280 = scmp.ne.s32.totalorder %s266, %s267
    %p281 = scmp.eq.s32.totalorder %s23, 1
    %p282 = por %p280, %p281
    %p284 = scmp.ne.s32.totalorder %s267, %s283
    %p285 = scmp.eq.s32.totalorder %s23, 0
    %p286 = por %p284, %p285
    %p287 = scmp.le.s32.totalorder 1, %s17
    %p288 = scmp.lt.s32.totalorder %s17, 3
    %p289 = pnand %p287, %p288
    %p290 = pneg %p289
    // Predicated region
    $region9: #{tpu_custom_call.1} parent=5 // pred_check
      _
    $region10: #{tpu_custom_call.1} parent=5 // pred_check_branch
      %292 = sbr.rel (%p289) target = $region12
    $region11: #{tpu_custom_call.1} parent=5 // pred_region
      %s293 = ssub.s32 %s17, 1
      // Predicated region
      $region13: #{tpu_custom_call.1} parent=11 // pred_check
        %p294 = pneg %p64
      $region14: #{tpu_custom_call.1} parent=11 // pred_check_branch
        %296 = sbr.rel (%p294) target = $region16
      $region15: #{tpu_custom_call.1} parent=11 // pred_region
        _
      $region16: #{tpu_custom_call.1} parent=11 // pred_fallthru
        _
      // Predicated region
      $region17: #{tpu_custom_call.1} parent=11 // pred_check
        %p297 = pneg %p85
      $region18: #{tpu_custom_call.1} parent=11 // pred_check_branch
        %299 = sbr.rel (%p297) target = $region20
      $region19: #{tpu_custom_call.1} parent=11 // pred_region
        _
      $region20: #{tpu_custom_call.1} parent=11 // pred_fallthru
        _
      // Predicated region
      $region21: #{tpu_custom_call.1} parent=11 // pred_check
        %p300 = pneg %p106
      $region22: #{tpu_custom_call.1} parent=11 // pred_check_branch
        %302 = sbr.rel (%p300) target = $region24
      $region23: #{tpu_custom_call.1} parent=11 // pred_region
        _
      $region24: #{tpu_custom_call.1} parent=11 // pred_fallthru
        _
      // Predicated region
      $region25: #{tpu_custom_call.1} parent=11 // pred_check
        %p303 = pneg %p127
      $region26: #{tpu_custom_call.1} parent=11 // pred_check_branch
        %305 = sbr.rel (%p303) target = $region28
      $region27: #{tpu_custom_call.1} parent=11 // pred_region
        _
      $region28: #{tpu_custom_call.1} parent=11 // pred_fallthru
        _
      // Predicated region
      $region29: #{tpu_custom_call.1} parent=11 // pred_check
        %p306 = pneg %p148
      $region30: #{tpu_custom_call.1} parent=11 // pred_check_branch
        %308 = sbr.rel (%p306) target = $region32
      $region31: #{tpu_custom_call.1} parent=11 // pred_region
        _
      $region32: #{tpu_custom_call.1} parent=11 // pred_fallthru
        _
      // Predicated region
      $region33: #{tpu_custom_call.1} parent=11 // pred_check
        %p309 = pneg %p169
      $region34: #{tpu_custom_call.1} parent=11 // pred_check_branch
        %311 = sbr.rel (%p309) target = $region36
      $region35: #{tpu_custom_call.1} parent=11 // pred_region
        _
      $region36: #{tpu_custom_call.1} parent=11 // pred_fallthru
        _
      // Predicated region
      $region37: #{tpu_custom_call.1} parent=11 // pred_check
        %p312 = pneg %p190
      $region38: #{tpu_custom_call.1} parent=11 // pred_check_branch
        %314 = sbr.rel (%p312) target = $region40
      $region39: #{tpu_custom_call.1} parent=11 // pred_region
        _
      $region40: #{tpu_custom_call.1} parent=11 // pred_fallthru
        _
      // Predicated region
      $region41: #{tpu_custom_call.1} parent=11 // pred_check
        %p315 = pneg %p211
      $region42: #{tpu_custom_call.1} parent=11 // pred_check_branch
        %317 = sbr.rel (%p315) target = $region44
      $region43: #{tpu_custom_call.1} parent=11 // pred_region
        _
      $region44: #{tpu_custom_call.1} parent=11 // pred_fallthru
        _
      // Predicated region
      $region45: #{tpu_custom_call.1} parent=11 // pred_check
        %p318 = pneg %p232
      $region46: #{tpu_custom_call.1} parent=11 // pred_check_branch
        %320 = sbr.rel (%p318) target = $region48
      $region47: #{tpu_custom_call.1} parent=11 // pred_region
        _
      $region48: #{tpu_custom_call.1} parent=11 // pred_fallthru
        _
      // Predicated region
      $region49: #{tpu_custom_call.1} parent=11 // pred_check
        %p321 = pneg %p253
      $region50: #{tpu_custom_call.1} parent=11 // pred_check_branch
        %323 = sbr.rel (%p321) target = $region52
      $region51: #{tpu_custom_call.1} parent=11 // pred_region
        _
      $region52: #{tpu_custom_call.1} parent=11 // pred_fallthru
        _
    $region12: #{tpu_custom_call.1} parent=5 // pred_fallthru
      _
    %p324 = scmp.lt.s32.totalorder %s17, 2
    // Predicated region
    $region53: #{tpu_custom_call.1} parent=5 // pred_check
      %p325 = pneg %p324
    $region54: #{tpu_custom_call.1} parent=5 // pred_check_branch
      %327 = sbr.rel (%p325) target = $region56
    $region55: #{tpu_custom_call.1} parent=5 // pred_region
      // Predicated region
      $region57: #{tpu_custom_call.1} parent=55 // pred_check
        %p328 = pneg %p37
      $region58: #{tpu_custom_call.1} parent=55 // pred_check_branch
        %330 = sbr.rel (%p328) target = $region60
      $region59: #{tpu_custom_call.1} parent=55 // pred_region
        %s331 = smul.u32 16, %s17
        %p332 = scmp.lt.s32.totalorder %s331, 31
        %s333 = scalar_select %p332, %s331, 31
        %s334 = smul.addr %s333, 8
        %s335 = scalar_lea.vmem %s0, %s334
        %s336 = smul.u32 16, %s17
      $region60: #{tpu_custom_call.1} parent=55 // pred_fallthru
        _
    $region56: #{tpu_custom_call.1} parent=5 // pred_fallthru
      _
    %p337 = scmp.le.s32.totalorder 1, %s17
    %p338 = scmp.lt.s32.totalorder %s17, 3
    %p339 = pnand %p337, %p338
    %p340 = pneg %p339
    // Predicated region
    $region61: #{tpu_custom_call.1} parent=5 // pred_check
      _
    $region62: #{tpu_custom_call.1} parent=5 // pred_check_branch
      %342 = sbr.rel (%p339) target = $region64
    $region63: #{tpu_custom_call.1} parent=5 // pred_region
      %s343 = ssub.s32 %s17, 1
      %s344 = smul.u32 16, %s22
      %p345 = scmp.lt.s32.totalorder %s344, 31
      %s346 = scalar_select %p345, %s344, 31
      %s347 = smul.addr %s346, 8
      %s348 = scalar_lea.vmem %s0, %s347
      %p349 = pneg %p43
      %p350 = pneg %p40
      %p351 = pneg %p64
      %p352 = pneg %p61
      %p353 = pneg %p85
      %p354 = pneg %p82
      %p355 = pneg %p106
      %p356 = pneg %p103
      %p357 = pneg %p127
      %p358 = pneg %p124
      %p359 = pneg %p148
      %p360 = pneg %p145
      %p361 = pneg %p169
      %p362 = pneg %p166
      %p363 = pneg %p190
      %p364 = pneg %p187
      %p365 = pneg %p211
      %p366 = pneg %p208
      %p367 = pneg %p232
      %p368 = pneg %p229
      %p369 = pneg %p253
      %p370 = pneg %p250
      %p371 = pneg %p279
      %p372 = pneg %p276
      %s373 = smul.u32 16, %s22
      %p374 = scmp.lt.s32.totalorder %s373, 31
      %s375 = scalar_select %p374, %s373, 31
      %s376 = smul.addr %s375, 8
      %s377 = scalar_lea.vmem %s11, %s376
      %s378 = smul.u32 16, %s22
      %p379 = scmp.lt.s32.totalorder %s378, 31
      %s380 = scalar_select %p379, %s378, 31
      %s381 = smul.addr %s380, 8
      %s382 = scalar_lea.vmem %s0, %s381
      %s383 = smul.u32 16, %s22
      %s384 = smul.u32 16, %s22
      %p385 = scmp.lt.s32.totalorder %s384, 31
      %s386 = scalar_select %p385, %s384, 31
      %s387 = smul.addr %s386, 8
      %s388 = scalar_lea.vmem %s11, %s387
      %s389 = smul.u32 16, %s22
      %v390 = vld [vmem:[%s382] sm:$0xff]
      %v391 = vld [vmem:[%s382 + $0x8] sm:$0xff]
      %v392 = vld [vmem:[%s382 + $0x10] sm:$0xff]
      %v393 = vld [vmem:[%s382 + $0x18] sm:$0xff]
      %v394 = vld [vmem:[%s382 + $0x20] sm:$0xff]
      %v395 = vld [vmem:[%s382 + $0x28] sm:$0xff]
      %v396 = vld [vmem:[%s382 + $0x30] sm:$0xff]
      %v397 = vld [vmem:[%s382 + $0x38] sm:$0xff]
      %v398 = vld [vmem:[%s382 + $0x40] sm:$0xff]
      %v399 = vld [vmem:[%s382 + $0x48] sm:$0xff]
      %v400 = vld [vmem:[%s382 + $0x50] sm:$0xff]
      %v401 = vld [vmem:[%s382 + $0x58] sm:$0xff]
      %v402 = vld [vmem:[%s382 + $0x60] sm:$0xff]
      %v403 = vld [vmem:[%s382 + $0x68] sm:$0xff]
      %v404 = vld [vmem:[%s382 + $0x70] sm:$0xff]
      %v405 = vld [vmem:[%s382 + $0x78] sm:$0xff]
      %v406 = vld [vmem:[%s1] sm:$0xf]
      %v407 = vld [vmem:[%s2] sm:$0x3]
      %409 = vset.pattern.permute.xlu0 0
      %410 = vperm.xlu0 %409, %v390
      %v411 = vpop.permute.xlu0 %410
      %414 = vset.pattern.permute.xlu0 0
      %415 = vperm.xlu0 %414, %v391
      %v416 = vpop.permute.xlu0 %415
      %419 = vset.pattern.permute.xlu0 0
      %420 = vperm.xlu0 %419, %v392
      %v421 = vpop.permute.xlu0 %420
      %424 = vset.pattern.permute.xlu0 0
      %425 = vperm.xlu0 %424, %v393
      %v426 = vpop.permute.xlu0 %425
      %429 = vset.pattern.permute.xlu0 0
      %430 = vperm.xlu0 %429, %v394
      %v431 = vpop.permute.xlu0 %430
      %434 = vset.pattern.permute.xlu0 0
      %435 = vperm.xlu0 %434, %v395
      %v436 = vpop.permute.xlu0 %435
      %439 = vset.pattern.permute.xlu0 0
      %440 = vperm.xlu0 %439, %v396
      %v441 = vpop.permute.xlu0 %440
      %444 = vset.pattern.permute.xlu0 0
      %445 = vperm.xlu0 %444, %v397
      %v446 = vpop.permute.xlu0 %445
      %449 = vset.pattern.permute.xlu0 0
      %450 = vperm.xlu0 %449, %v398
      %v451 = vpop.permute.xlu0 %450
      %454 = vset.pattern.permute.xlu0 0
      %455 = vperm.xlu0 %454, %v399
      %v456 = vpop.permute.xlu0 %455
      %459 = vset.pattern.permute.xlu0 0
      %460 = vperm.xlu0 %459, %v400
      %v461 = vpop.permute.xlu0 %460
      %464 = vset.pattern.permute.xlu0 0
      %465 = vperm.xlu0 %464, %v401
      %v466 = vpop.permute.xlu0 %465
      %469 = vset.pattern.permute.xlu0 0
      %470 = vperm.xlu0 %469, %v402
      %v471 = vpop.permute.xlu0 %470
      %474 = vset.pattern.permute.xlu0 0
      %475 = vperm.xlu0 %474, %v403
      %v476 = vpop.permute.xlu0 %475
      %479 = vset.pattern.permute.xlu0 0
      %480 = vperm.xlu0 %479, %v404
      %v481 = vpop.permute.xlu0 %480
      %484 = vset.pattern.permute.xlu0 0
      %485 = vperm.xlu0 %484, %v405
      %v486 = vpop.permute.xlu0 %485
      %v489 = vlaneseq
      %v490 = vshrl.u32 %v489, 7
      %v491 = vsub.s32 0, %v490
      %v492 = vrot.slane %v406, %v491
      %v493 = vlaneseq
      %v494 = vshrl.u32 %v493, 7
      %v495 = vsub.s32 2, %v494
      %v496 = vrot.slane %v406, %v495
      %v499 = vlaneseq
      %v500 = vshrl.u32 %v499, 7
      %v501 = vsub.s32 0, %v500
      %v502 = vrot.slane %v492, %v501
      %v503 = vlaneseq
      %v504 = vshrl.u32 %v503, 7
      %v505 = vsub.s32 0, %v504
      %v506 = vrot.slane %v496, %v505
      %v507 = vmul.f32 %v411, %v502
      %v508 = vmul.f32 %v411, %v506
      %v509 = vmul.f32 %v416, %v502
      %v510 = vmul.f32 %v416, %v506
      %v511 = vmul.f32 %v421, %v502
      %v512 = vmul.f32 %v421, %v506
      %v513 = vmul.f32 %v426, %v502
      %v514 = vmul.f32 %v426, %v506
      %v515 = vmul.f32 %v431, %v502
      %v516 = vmul.f32 %v431, %v506
      %v517 = vmul.f32 %v436, %v502
      %v518 = vmul.f32 %v436, %v506
      %v519 = vmul.f32 %v441, %v502
      %v520 = vmul.f32 %v441, %v506
      %v521 = vmul.f32 %v446, %v502
      %v522 = vmul.f32 %v446, %v506
      %v523 = vmul.f32 %v451, %v502
      %v524 = vmul.f32 %v451, %v506
      %v525 = vmul.f32 %v456, %v502
      %v526 = vmul.f32 %v456, %v506
      %v527 = vmul.f32 %v461, %v502
      %v528 = vmul.f32 %v461, %v506
      %v529 = vmul.f32 %v466, %v502
      %v530 = vmul.f32 %v466, %v506
      %v531 = vmul.f32 %v471, %v502
      %v532 = vmul.f32 %v471, %v506
      %v533 = vmul.f32 %v476, %v502
      %v534 = vmul.f32 %v476, %v506
      %v535 = vmul.f32 %v481, %v502
      %v536 = vmul.f32 %v481, %v506
      %v537 = vmul.f32 %v486, %v502
      %v538 = vmul.f32 %v486, %v506
      %v540 = vlaneseq
      %v541 = vshrl.u32 %v540, 7
      %v542 = vsub.s32 0, %v541
      %v543 = vrot.slane %v407, %v542
      %v544 = vlaneseq
      %v545 = vshrl.u32 %v544, 7
      %v546 = vsub.s32 1, %v545
      %v547 = vrot.slane %v407, %v546
      %v550 = vadd.f32 %v543, %v507
      %v551 = vadd.f32 %v547, %v508
      %v552 = vadd.f32 %v543, %v509
      %v553 = vadd.f32 %v547, %v510
      %v554 = vadd.f32 %v543, %v511
      %v555 = vadd.f32 %v547, %v512
      %v556 = vadd.f32 %v543, %v513
      %v557 = vadd.f32 %v547, %v514
      %v558 = vadd.f32 %v543, %v515
      %v559 = vadd.f32 %v547, %v516
      %v560 = vadd.f32 %v543, %v517
      %v561 = vadd.f32 %v547, %v518
      %v562 = vadd.f32 %v543, %v519
      %v563 = vadd.f32 %v547, %v520
      %v564 = vadd.f32 %v543, %v521
      %v565 = vadd.f32 %v547, %v522
      %v566 = vadd.f32 %v543, %v523
      %v567 = vadd.f32 %v547, %v524
      %v568 = vadd.f32 %v543, %v525
      %v569 = vadd.f32 %v547, %v526
      %v570 = vadd.f32 %v543, %v527
      %v571 = vadd.f32 %v547, %v528
      %v572 = vadd.f32 %v543, %v529
      %v573 = vadd.f32 %v547, %v530
      %v574 = vadd.f32 %v543, %v531
      %v575 = vadd.f32 %v547, %v532
      %v576 = vadd.f32 %v543, %v533
      %v577 = vadd.f32 %v547, %v534
      %v578 = vadd.f32 %v543, %v535
      %v579 = vadd.f32 %v547, %v536
      %v580 = vadd.f32 %v543, %v537
      %v581 = vadd.f32 %v547, %v538
      %582 = vset.pattern.permute.xlu0 1
      %583 = vperm.xlu0 %582, %v390
      %v584 = vpop.permute.xlu0 %583
      %586 = vset.pattern.permute.xlu0 1
      %587 = vperm.xlu0 %586, %v391
      %v588 = vpop.permute.xlu0 %587
      %590 = vset.pattern.permute.xlu0 1
      %591 = vperm.xlu0 %590, %v392
      %v592 = vpop.permute.xlu0 %591
      %594 = vset.pattern.permute.xlu0 1
      %595 = vperm.xlu0 %594, %v393
      %v596 = vpop.permute.xlu0 %595
      %598 = vset.pattern.permute.xlu0 1
      %599 = vperm.xlu0 %598, %v394
      %v600 = vpop.permute.xlu0 %599
      %602 = vset.pattern.permute.xlu0 1
      %603 = vperm.xlu0 %602, %v395
      %v604 = vpop.permute.xlu0 %603
      %606 = vset.pattern.permute.xlu0 1
      %607 = vperm.xlu0 %606, %v396
      %v608 = vpop.permute.xlu0 %607
      %610 = vset.pattern.permute.xlu0 1
      %611 = vperm.xlu0 %610, %v397
      %v612 = vpop.permute.xlu0 %611
      %614 = vset.pattern.permute.xlu0 1
      %615 = vperm.xlu0 %614, %v398
      %v616 = vpop.permute.xlu0 %615
      %618 = vset.pattern.permute.xlu0 1
      %619 = vperm.xlu0 %618, %v399
      %v620 = vpop.permute.xlu0 %619
      %622 = vset.pattern.permute.xlu0 1
      %623 = vperm.xlu0 %622, %v400
      %v624 = vpop.permute.xlu0 %623
      %626 = vset.pattern.permute.xlu0 1
      %627 = vperm.xlu0 %626, %v401
      %v628 = vpop.permute.xlu0 %627
      %630 = vset.pattern.permute.xlu0 1
      %631 = vperm.xlu0 %630, %v402
      %v632 = vpop.permute.xlu0 %631
      %634 = vset.pattern.permute.xlu0 1
      %635 = vperm.xlu0 %634, %v403
      %v636 = vpop.permute.xlu0 %635
      %638 = vset.pattern.permute.xlu0 1
      %639 = vperm.xlu0 %638, %v404
      %v640 = vpop.permute.xlu0 %639
      %642 = vset.pattern.permute.xlu0 1
      %643 = vperm.xlu0 %642, %v405
      %v644 = vpop.permute.xlu0 %643
      %v646 = vlaneseq
      %v647 = vshrl.u32 %v646, 7
      %v648 = vsub.s32 1, %v647
      %v649 = vrot.slane %v406, %v648
      %v650 = vlaneseq
      %v651 = vshrl.u32 %v650, 7
      %v652 = vsub.s32 3, %v651
      %v653 = vrot.slane %v406, %v652
      %v656 = vlaneseq
      %v657 = vshrl.u32 %v656, 7
      %v658 = vsub.s32 1, %v657
      %v659 = vrot.slane %v649, %v658
      %v660 = vlaneseq
      %v661 = vshrl.u32 %v660, 7
      %v662 = vsub.s32 1, %v661
      %v663 = vrot.slane %v653, %v662
      %v664 = vmul.f32 %v584, %v659
      %v665 = vmul.f32 %v584, %v663
      %v666 = vmul.f32 %v588, %v659
      %v667 = vmul.f32 %v588, %v663
      %v668 = vmul.f32 %v592, %v659
      %v669 = vmul.f32 %v592, %v663
      %v670 = vmul.f32 %v596, %v659
      %v671 = vmul.f32 %v596, %v663
      %v672 = vmul.f32 %v600, %v659
      %v673 = vmul.f32 %v600, %v663
      %v674 = vmul.f32 %v604, %v659
      %v675 = vmul.f32 %v604, %v663
      %v676 = vmul.f32 %v608, %v659
      %v677 = vmul.f32 %v608, %v663
      %v678 = vmul.f32 %v612, %v659
      %v679 = vmul.f32 %v612, %v663
      %v680 = vmul.f32 %v616, %v659
      %v681 = vmul.f32 %v616, %v663
      %v682 = vmul.f32 %v620, %v659
      %v683 = vmul.f32 %v620, %v663
      %v684 = vmul.f32 %v624, %v659
      %v685 = vmul.f32 %v624, %v663
      %v686 = vmul.f32 %v628, %v659
      %v687 = vmul.f32 %v628, %v663
      %v688 = vmul.f32 %v632, %v659
      %v689 = vmul.f32 %v632, %v663
      %v690 = vmul.f32 %v636, %v659
      %v691 = vmul.f32 %v636, %v663
      %v692 = vmul.f32 %v640, %v659
      %v693 = vmul.f32 %v640, %v663
      %v694 = vmul.f32 %v644, %v659
      %v695 = vmul.f32 %v644, %v663
      %v696 = vadd.f32 %v550, %v664
      %v697 = vadd.f32 %v551, %v665
      %v698 = vadd.f32 %v552, %v666
      %v699 = vadd.f32 %v553, %v667
      %v700 = vadd.f32 %v554, %v668
      %v701 = vadd.f32 %v555, %v669
      %v702 = vadd.f32 %v556, %v670
      %v703 = vadd.f32 %v557, %v671
      %v704 = vadd.f32 %v558, %v672
      %v705 = vadd.f32 %v559, %v673
      %v706 = vadd.f32 %v560, %v674
      %v707 = vadd.f32 %v561, %v675
      %v708 = vadd.f32 %v562, %v676
      %v709 = vadd.f32 %v563, %v677
      %v710 = vadd.f32 %v564, %v678
      %v711 = vadd.f32 %v565, %v679
      %v712 = vadd.f32 %v566, %v680
      %v713 = vadd.f32 %v567, %v681
      %v714 = vadd.f32 %v568, %v682
      %v715 = vadd.f32 %v569, %v683
      %v716 = vadd.f32 %v570, %v684
      %v717 = vadd.f32 %v571, %v685
      %v718 = vadd.f32 %v572, %v686
      %v719 = vadd.f32 %v573, %v687
      %v720 = vadd.f32 %v574, %v688
      %v721 = vadd.f32 %v575, %v689
      %v722 = vadd.f32 %v576, %v690
      %v723 = vadd.f32 %v577, %v691
      %v724 = vadd.f32 %v578, %v692
      %v725 = vadd.f32 %v579, %v693
      %v726 = vadd.f32 %v580, %v694
      %v727 = vadd.f32 %v581, %v695
      %v728 = vmax.f32 %v696, 0.0
      %v729 = vmax.f32 %v697, 0.0
      %v730 = vmax.f32 %v698, 0.0
      %v731 = vmax.f32 %v699, 0.0
      %v732 = vmax.f32 %v700, 0.0
      %v733 = vmax.f32 %v701, 0.0
      %v734 = vmax.f32 %v702, 0.0
      %v735 = vmax.f32 %v703, 0.0
      %v736 = vmax.f32 %v704, 0.0
      %v737 = vmax.f32 %v705, 0.0
      %v738 = vmax.f32 %v706, 0.0
      %v739 = vmax.f32 %v707, 0.0
      %v740 = vmax.f32 %v708, 0.0
      %v741 = vmax.f32 %v709, 0.0
      %v742 = vmax.f32 %v710, 0.0
      %v743 = vmax.f32 %v711, 0.0
      %v744 = vmax.f32 %v712, 0.0
      %v745 = vmax.f32 %v713, 0.0
      %v746 = vmax.f32 %v714, 0.0
      %v747 = vmax.f32 %v715, 0.0
      %v748 = vmax.f32 %v716, 0.0
      %v749 = vmax.f32 %v717, 0.0
      %v750 = vmax.f32 %v718, 0.0
      %v751 = vmax.f32 %v719, 0.0
      %v752 = vmax.f32 %v720, 0.0
      %v753 = vmax.f32 %v721, 0.0
      %v754 = vmax.f32 %v722, 0.0
      %v755 = vmax.f32 %v723, 0.0
      %v756 = vmax.f32 %v724, 0.0
      %v757 = vmax.f32 %v725, 0.0
      %v758 = vmax.f32 %v726, 0.0
      %v759 = vmax.f32 %v727, 0.0
      %v760 = vpack.c.bf16 %v730, %v728
      %v761 = vpack.c.bf16 %v731, %v729
      %v762 = vpack.c.bf16 %v734, %v732
      %v763 = vpack.c.bf16 %v735, %v733
      %v764 = vpack.c.bf16 %v738, %v736
      %v765 = vpack.c.bf16 %v739, %v737
      %v766 = vpack.c.bf16 %v742, %v740
      %v767 = vpack.c.bf16 %v743, %v741
      %v768 = vpack.c.bf16 %v746, %v744
      %v769 = vpack.c.bf16 %v747, %v745
      %v770 = vpack.c.bf16 %v750, %v748
      %v771 = vpack.c.bf16 %v751, %v749
      %v772 = vpack.c.bf16 %v754, %v752
      %v773 = vpack.c.bf16 %v755, %v753
      %v774 = vpack.c.bf16 %v758, %v756
      %v775 = vpack.c.bf16 %v759, %v757
      %v776 = vld [vmem:[%s3] sm:$0xff]
      %v777 = vld [vmem:[%s3 + $0x8] sm:$0xff]
      %v778 = vld [vmem:[%s3 + $0x10] sm:$0xff]
      %v779 = vld [vmem:[%s3 + $0x18] sm:$0xff]
      %v780 = vld [vmem:[%s3 + $0x20] sm:$0xff]
      %v781 = vld [vmem:[%s3 + $0x28] sm:$0xff]
      %v782 = vld [vmem:[%s3 + $0x30] sm:$0xff]
      %v783 = vld [vmem:[%s3 + $0x38] sm:$0xff]
      %v784 = vld [vmem:[%s3 + $0x40] sm:$0xff]
      %v785 = vld [vmem:[%s3 + $0x48] sm:$0xff]
      %v786 = vld [vmem:[%s3 + $0x50] sm:$0xff]
      %v787 = vld [vmem:[%s3 + $0x58] sm:$0xff]
      %v788 = vld [vmem:[%s3 + $0x60] sm:$0xff]
      %v789 = vld [vmem:[%s3 + $0x68] sm:$0xff]
      %v790 = vld [vmem:[%s3 + $0x70] sm:$0xff]
      %v791 = vld [vmem:[%s3 + $0x78] sm:$0xff]
      %v792 = vld [vmem:[%s3 + $0x80] sm:$0xff]
      %v793 = vld [vmem:[%s3 + $0x88] sm:$0xff]
      %v794 = vld [vmem:[%s3 + $0x90] sm:$0xff]
      %v795 = vld [vmem:[%s3 + $0x98] sm:$0xff]
      %v796 = vld [vmem:[%s3 + $0xa0] sm:$0xff]
      %v797 = vld [vmem:[%s3 + $0xa8] sm:$0xff]
      %v798 = vld [vmem:[%s3 + $0xb0] sm:$0xff]
      %v799 = vld [vmem:[%s3 + $0xb8] sm:$0xff]
      %v800 = vld [vmem:[%s3 + $0xc0] sm:$0xff]
      %v801 = vld [vmem:[%s3 + $0xc8] sm:$0xff]
      %v802 = vld [vmem:[%s3 + $0xd0] sm:$0xff]
      %v803 = vld [vmem:[%s3 + $0xd8] sm:$0xff]
      %v804 = vld [vmem:[%s3 + $0xe0] sm:$0xff]
      %v805 = vld [vmem:[%s3 + $0xe8] sm:$0xff]
      %v806 = vld [vmem:[%s3 + $0xf0] sm:$0xff]
      %v807 = vld [vmem:[%s3 + $0xf8] sm:$0xff]
      %v808 = vld [vmem:[%s4] sm:$0x3]
      %v810 = vlaneseq
      %v811 = vshrl.u32 %v810, 7
      %v812 = vsub.s32 0, %v811
      %v813 = vrot.slane %v808, %v812
      %v814 = vlaneseq
      %v815 = vshrl.u32 %v814, 7
      %v816 = vsub.s32 1, %v815
      %v817 = vrot.slane %v808, %v816
      %v852 = vunpack.c.l.b16 %v776
      %v853 = vunpack.c.h.b16 %v776
      %v854 = vunpack.c.l.b16 %v777
      %v855 = vunpack.c.h.b16 %v777
      %v856 = vunpack.c.l.b16 %v778
      %v857 = vunpack.c.h.b16 %v778
      %v858 = vunpack.c.l.b16 %v779
      %v859 = vunpack.c.h.b16 %v779
      %v860 = vunpack.c.l.b16 %v780
      %v861 = vunpack.c.h.b16 %v780
      %v862 = vunpack.c.l.b16 %v781
      %v863 = vunpack.c.h.b16 %v781
      %v864 = vunpack.c.l.b16 %v782
      %v865 = vunpack.c.h.b16 %v782
      %v866 = vunpack.c.l.b16 %v783
      %v867 = vunpack.c.h.b16 %v783
      %v868 = vunpack.c.l.b16 %v784
      %v869 = vunpack.c.h.b16 %v784
      %v870 = vunpack.c.l.b16 %v785
      %v871 = vunpack.c.h.b16 %v785
      %v872 = vunpack.c.l.b16 %v786
      %v873 = vunpack.c.h.b16 %v786
      %v874 = vunpack.c.l.b16 %v787
      %v875 = vunpack.c.h.b16 %v787
      %v876 = vunpack.c.l.b16 %v788
      %v877 = vunpack.c.h.b16 %v788
      %v878 = vunpack.c.l.b16 %v789
      %v879 = vunpack.c.h.b16 %v789
      %v880 = vunpack.c.l.b16 %v790
      %v881 = vunpack.c.h.b16 %v790
      %v882 = vunpack.c.l.b16 %v791
      %v883 = vunpack.c.h.b16 %v791
      %v884 = vunpack.c.l.b16 %v792
      %v885 = vunpack.c.h.b16 %v792
      %v886 = vunpack.c.l.b16 %v793
      %v887 = vunpack.c.h.b16 %v793
      %v888 = vunpack.c.l.b16 %v794
      %v889 = vunpack.c.h.b16 %v794
      %v890 = vunpack.c.l.b16 %v795
      %v891 = vunpack.c.h.b16 %v795
      %v892 = vunpack.c.l.b16 %v796
      %v893 = vunpack.c.h.b16 %v796
      %v894 = vunpack.c.l.b16 %v797
      %v895 = vunpack.c.h.b16 %v797
      %v896 = vunpack.c.l.b16 %v798
      %v897 = vunpack.c.h.b16 %v798
      %v898 = vunpack.c.l.b16 %v799
      %v899 = vunpack.c.h.b16 %v799
      %v900 = vunpack.c.l.b16 %v800
      %v901 = vunpack.c.h.b16 %v800
      %v902 = vunpack.c.l.b16 %v801
      %v903 = vunpack.c.h.b16 %v801
      %v904 = vunpack.c.l.b16 %v802
      %v905 = vunpack.c.h.b16 %v802
      %v906 = vunpack.c.l.b16 %v803
      %v907 = vunpack.c.h.b16 %v803
      %v908 = vunpack.c.l.b16 %v804
      %v909 = vunpack.c.h.b16 %v804
      %v910 = vunpack.c.l.b16 %v805
      %v911 = vunpack.c.h.b16 %v805
      %v912 = vunpack.c.l.b16 %v806
      %v913 = vunpack.c.h.b16 %v806
      %v914 = vunpack.c.l.b16 %v807
      %v915 = vunpack.c.h.b16 %v807
      %v916 = vpack.c.b16 %v854, %v852
      %v917 = vpack.c.b16 %v855, %v853
      %v918 = vpack.c.b16 %v858, %v856
      %v919 = vpack.c.b16 %v859, %v857
      %v920 = vpack.c.b16 %v862, %v860
      %v921 = vpack.c.b16 %v863, %v861
      %v922 = vpack.c.b16 %v866, %v864
      %v923 = vpack.c.b16 %v867, %v865
      %v924 = vpack.c.b16 %v870, %v868
      %v925 = vpack.c.b16 %v871, %v869
      %v926 = vpack.c.b16 %v874, %v872
      %v927 = vpack.c.b16 %v875, %v873
      %v928 = vpack.c.b16 %v878, %v876
      %v929 = vpack.c.b16 %v879, %v877
      %v930 = vpack.c.b16 %v882, %v880
      %v931 = vpack.c.b16 %v883, %v881
      %v932 = vpack.c.b16 %v886, %v884
      %v933 = vpack.c.b16 %v887, %v885
      %v934 = vpack.c.b16 %v890, %v888
      %v935 = vpack.c.b16 %v891, %v889
      %v936 = vpack.c.b16 %v894, %v892
      %v937 = vpack.c.b16 %v895, %v893
      %v938 = vpack.c.b16 %v898, %v896
      %v939 = vpack.c.b16 %v899, %v897
      %v940 = vpack.c.b16 %v902, %v900
      %v941 = vpack.c.b16 %v903, %v901
      %v942 = vpack.c.b16 %v906, %v904
      %v943 = vpack.c.b16 %v907, %v905
      %v944 = vpack.c.b16 %v910, %v908
      %v945 = vpack.c.b16 %v911, %v909
      %v946 = vpack.c.b16 %v914, %v912
      %v947 = vpack.c.b16 %v915, %v913
      %980 = vmatprep.subr.bf16.mxu0 %v931
      %981 = vmatpush1.bf16.msra.mxu0 %v930
      %982 = vmatprep.subr.bf16.mxu0 %v929
      %983 = vmatpush1.bf16.msra.mxu0 %v928
      %984 = vmatprep.subr.bf16.mxu0 %v927
      %985 = vmatpush1.bf16.msra.mxu0 %v926
      %986 = vmatprep.subr.bf16.mxu0 %v925
      %987 = vmatpush1.bf16.msra.mxu0 %v924
      %988 = vmatprep.subr.bf16.mxu0 %v923
      %989 = vmatpush1.bf16.msra.mxu0 %v922
      %990 = vmatprep.subr.bf16.mxu0 %v921
      %991 = vmatpush1.bf16.msra.mxu0 %v920
      %992 = vmatprep.subr.bf16.mxu0 %v919
      %993 = vmatpush1.bf16.msra.mxu0 %v918
      %994 = vmatprep.subr.bf16.mxu0 %v917
      %995 = vmatpush1.bf16.msra.mxu0 %v916
      %996 = vmatprep.subr.bf16.mxu0 %v947
      %997 = vmatpush2.bf16.msra.mxu0 %v946
      %998 = vmatprep.subr.bf16.mxu0 %v945
      %999 = vmatpush2.bf16.msra.mxu0 %v944
      %1000 = vmatprep.subr.bf16.mxu0 %v943
      %1001 = vmatpush2.bf16.msra.mxu0 %v942
      %1002 = vmatprep.subr.bf16.mxu0 %v941
      %1003 = vmatpush2.bf16.msra.mxu0 %v940
      %1004 = vmatprep.subr.bf16.mxu0 %v939
      %1005 = vmatpush2.bf16.msra.mxu0 %v938
      %1006 = vmatprep.subr.bf16.mxu0 %v937
      %1007 = vmatpush2.bf16.msra.mxu0 %v936
      %1008 = vmatprep.subr.bf16.mxu0 %v935
      %1009 = vmatpush2.bf16.msra.mxu0 %v934
      %1010 = vmatprep.subr.bf16.mxu0 %v933
      %1011 = vmatpush2.bf16.msra.mxu0 %v932
      %1012 = vmatprep.mubr.bf16.mxu0 %v761
      %1013 = vmatmul.mubr.bf16.gmra.mxu0 %v760
      %v1014 = vpop.f32.mrf.mxu0
      %v1015 = vadd.f32 %v813, %v1014
      %v1016 = vpop.f32.mrf.mxu0
      %v1017 = vadd.f32 %v817, %v1016
      %v1018 = vpop.f32.mrf.mxu0
      %v1019 = vadd.f32 %v813, %v1018
      %v1020 = vpop.f32.mrf.mxu0
      %v1021 = vadd.f32 %v817, %v1020
      %1022 = vmatprep.mubr.bf16.mxu0 %v763
      %1023 = vmatmul.mubr.bf16.gmra.mxu0 %v762
      %v1024 = vpop.f32.mrf.mxu0
      %v1025 = vadd.f32 %v813, %v1024
      %v1026 = vpop.f32.mrf.mxu0
      %v1027 = vadd.f32 %v817, %v1026
      %v1028 = vpop.f32.mrf.mxu0
      %v1029 = vadd.f32 %v813, %v1028
      %v1030 = vpop.f32.mrf.mxu0
      %v1031 = vadd.f32 %v817, %v1030
      %1032 = vmatprep.mubr.bf16.mxu0 %v765
      %1033 = vmatmul.mubr.bf16.gmra.mxu0 %v764
      %v1034 = vpop.f32.mrf.mxu0
      %v1035 = vadd.f32 %v813, %v1034
      %v1036 = vpop.f32.mrf.mxu0
      %v1037 = vadd.f32 %v817, %v1036
      %v1038 = vpop.f32.mrf.mxu0
      %v1039 = vadd.f32 %v813, %v1038
      %v1040 = vpop.f32.mrf.mxu0
      %v1041 = vadd.f32 %v817, %v1040
      %1042 = vmatprep.mubr.bf16.mxu0 %v767
      %1043 = vmatmul.mubr.bf16.gmra.mxu0 %v766
      %v1044 = vpop.f32.mrf.mxu0
      %v1045 = vadd.f32 %v813, %v1044
      %v1046 = vpop.f32.mrf.mxu0
      %v1047 = vadd.f32 %v817, %v1046
      %v1048 = vpop.f32.mrf.mxu0
      %v1049 = vadd.f32 %v813, %v1048
      %v1050 = vpop.f32.mrf.mxu0
      %v1051 = vadd.f32 %v817, %v1050
      %1052 = vmatprep.mubr.bf16.mxu0 %v769
      %1053 = vmatmul.mubr.bf16.gmra.mxu0 %v768
      %v1054 = vpop.f32.mrf.mxu0
      %v1055 = vadd.f32 %v813, %v1054
      %v1056 = vpop.f32.mrf.mxu0
      %v1057 = vadd.f32 %v817, %v1056
      %v1058 = vpop.f32.mrf.mxu0
      %v1059 = vadd.f32 %v813, %v1058
      %v1060 = vpop.f32.mrf.mxu0
      %v1061 = vadd.f32 %v817, %v1060
      %1062 = vmatprep.mubr.bf16.mxu0 %v771
      %1063 = vmatmul.mubr.bf16.gmra.mxu0 %v770
      %v1064 = vpop.f32.mrf.mxu0
      %v1065 = vadd.f32 %v813, %v1064
      %v1066 = vpop.f32.mrf.mxu0
      %v1067 = vadd.f32 %v817, %v1066
      %v1068 = vpop.f32.mrf.mxu0
      %v1069 = vadd.f32 %v813, %v1068
      %v1070 = vpop.f32.mrf.mxu0
      %v1071 = vadd.f32 %v817, %v1070
      %1072 = vmatprep.mubr.bf16.mxu0 %v773
      %1073 = vmatmul.mubr.bf16.gmra.mxu0 %v772
      %v1074 = vpop.f32.mrf.mxu0
      %v1075 = vadd.f32 %v813, %v1074
      %v1076 = vpop.f32.mrf.mxu0
      %v1077 = vadd.f32 %v817, %v1076
      %v1078 = vpop.f32.mrf.mxu0
      %v1079 = vadd.f32 %v813, %v1078
      %v1080 = vpop.f32.mrf.mxu0
      %v1081 = vadd.f32 %v817, %v1080
      %1082 = vmatprep.mubr.bf16.mxu0 %v775
      %1083 = vmatmul.mubr.bf16.gmra.mxu0 %v774
      %v1084 = vpop.f32.mrf.mxu0
      %v1085 = vadd.f32 %v813, %v1084
      %v1086 = vpop.f32.mrf.mxu0
      %v1087 = vadd.f32 %v817, %v1086
      %v1088 = vpop.f32.mrf.mxu0
      %v1089 = vadd.f32 %v813, %v1088
      %v1090 = vpop.f32.mrf.mxu0
      %v1091 = vadd.f32 %v817, %v1090
      %1092 = vdwg.mxu0
      %v1093 = vmax.f32 %v1015, 0.0
      %v1094 = vmax.f32 %v1017, 0.0
      %v1095 = vmax.f32 %v1019, 0.0
      %v1096 = vmax.f32 %v1021, 0.0
      %v1097 = vmax.f32 %v1025, 0.0
      %v1098 = vmax.f32 %v1027, 0.0
      %v1099 = vmax.f32 %v1029, 0.0
      %v1100 = vmax.f32 %v1031, 0.0
      %v1101 = vmax.f32 %v1035, 0.0
      %v1102 = vmax.f32 %v1037, 0.0
      %v1103 = vmax.f32 %v1039, 0.0
      %v1104 = vmax.f32 %v1041, 0.0
      %v1105 = vmax.f32 %v1045, 0.0
      %v1106 = vmax.f32 %v1047, 0.0
      %v1107 = vmax.f32 %v1049, 0.0
      %v1108 = vmax.f32 %v1051, 0.0
      %v1109 = vmax.f32 %v1055, 0.0
      %v1110 = vmax.f32 %v1057, 0.0
      %v1111 = vmax.f32 %v1059, 0.0
      %v1112 = vmax.f32 %v1061, 0.0
      %v1113 = vmax.f32 %v1065, 0.0
      %v1114 = vmax.f32 %v1067, 0.0
      %v1115 = vmax.f32 %v1069, 0.0
      %v1116 = vmax.f32 %v1071, 0.0
      %v1117 = vmax.f32 %v1075, 0.0
      %v1118 = vmax.f32 %v1077, 0.0
      %v1119 = vmax.f32 %v1079, 0.0
      %v1120 = vmax.f32 %v1081, 0.0
      %v1121 = vmax.f32 %v1085, 0.0
      %v1122 = vmax.f32 %v1087, 0.0
      %v1123 = vmax.f32 %v1089, 0.0
      %v1124 = vmax.f32 %v1091, 0.0
      %v1125 = vpack.c.bf16 %v1095, %v1093
      %v1126 = vpack.c.bf16 %v1096, %v1094
      %v1127 = vpack.c.bf16 %v1099, %v1097
      %v1128 = vpack.c.bf16 %v1100, %v1098
      %v1129 = vpack.c.bf16 %v1103, %v1101
      %v1130 = vpack.c.bf16 %v1104, %v1102
      %v1131 = vpack.c.bf16 %v1107, %v1105
      %v1132 = vpack.c.bf16 %v1108, %v1106
      %v1133 = vpack.c.bf16 %v1111, %v1109
      %v1134 = vpack.c.bf16 %v1112, %v1110
      %v1135 = vpack.c.bf16 %v1115, %v1113
      %v1136 = vpack.c.bf16 %v1116, %v1114
      %v1137 = vpack.c.bf16 %v1119, %v1117
      %v1138 = vpack.c.bf16 %v1120, %v1118
      %v1139 = vpack.c.bf16 %v1123, %v1121
      %v1140 = vpack.c.bf16 %v1124, %v1122
      %v1141 = vld [vmem:[%s5] sm:$0xff]
      %v1142 = vld [vmem:[%s5 + $0x8] sm:$0xff]
      %v1143 = vld [vmem:[%s5 + $0x10] sm:$0xff]
      %v1144 = vld [vmem:[%s5 + $0x18] sm:$0xff]
      %v1145 = vld [vmem:[%s5 + $0x20] sm:$0xff]
      %v1146 = vld [vmem:[%s5 + $0x28] sm:$0xff]
      %v1147 = vld [vmem:[%s5 + $0x30] sm:$0xff]
      %v1148 = vld [vmem:[%s5 + $0x38] sm:$0xff]
      %v1149 = vld [vmem:[%s5 + $0x40] sm:$0xff]
      %v1150 = vld [vmem:[%s5 + $0x48] sm:$0xff]
      %v1151 = vld [vmem:[%s5 + $0x50] sm:$0xff]
      %v1152 = vld [vmem:[%s5 + $0x58] sm:$0xff]
      %v1153 = vld [vmem:[%s5 + $0x60] sm:$0xff]
      %v1154 = vld [vmem:[%s5 + $0x68] sm:$0xff]
      %v1155 = vld [vmem:[%s5 + $0x70] sm:$0xff]
      %v1156 = vld [vmem:[%s5 + $0x78] sm:$0xff]
      %v1157 = vld [vmem:[%s5 + $0x80] sm:$0xff]
      %v1158 = vld [vmem:[%s5 + $0x88] sm:$0xff]
      %v1159 = vld [vmem:[%s5 + $0x90] sm:$0xff]
      %v1160 = vld [vmem:[%s5 + $0x98] sm:$0xff]
      %v1161 = vld [vmem:[%s5 + $0xa0] sm:$0xff]
      %v1162 = vld [vmem:[%s5 + $0xa8] sm:$0xff]
      %v1163 = vld [vmem:[%s5 + $0xb0] sm:$0xff]
      %v1164 = vld [vmem:[%s5 + $0xb8] sm:$0xff]
      %v1165 = vld [vmem:[%s5 + $0xc0] sm:$0xff]
      %v1166 = vld [vmem:[%s5 + $0xc8] sm:$0xff]
      %v1167 = vld [vmem:[%s5 + $0xd0] sm:$0xff]
      %v1168 = vld [vmem:[%s5 + $0xd8] sm:$0xff]
      %v1169 = vld [vmem:[%s5 + $0xe0] sm:$0xff]
      %v1170 = vld [vmem:[%s5 + $0xe8] sm:$0xff]
      %v1171 = vld [vmem:[%s5 + $0xf0] sm:$0xff]
      %v1172 = vld [vmem:[%s5 + $0xf8] sm:$0xff]
      %v1173 = vld [vmem:[%s6] sm:$0x3]
      %v1175 = vlaneseq
      %v1176 = vshrl.u32 %v1175, 7
      %v1177 = vsub.s32 0, %v1176
      %v1178 = vrot.slane %v1173, %v1177
      %v1179 = vlaneseq
      %v1180 = vshrl.u32 %v1179, 7
      %v1181 = vsub.s32 1, %v1180
      %v1182 = vrot.slane %v1173, %v1181
      %v1217 = vunpack.c.l.b16 %v1141
      %v1218 = vunpack.c.h.b16 %v1141
      %v1219 = vunpack.c.l.b16 %v1142
      %v1220 = vunpack.c.h.b16 %v1142
      %v1221 = vunpack.c.l.b16 %v1143
      %v1222 = vunpack.c.h.b16 %v1143
      %v1223 = vunpack.c.l.b16 %v1144
      %v1224 = vunpack.c.h.b16 %v1144
      %v1225 = vunpack.c.l.b16 %v1145
      %v1226 = vunpack.c.h.b16 %v1145
      %v1227 = vunpack.c.l.b16 %v1146
      %v1228 = vunpack.c.h.b16 %v1146
      %v1229 = vunpack.c.l.b16 %v1147
      %v1230 = vunpack.c.h.b16 %v1147
      %v1231 = vunpack.c.l.b16 %v1148
      %v1232 = vunpack.c.h.b16 %v1148
      %v1233 = vunpack.c.l.b16 %v1149
      %v1234 = vunpack.c.h.b16 %v1149
      %v1235 = vunpack.c.l.b16 %v1150
      %v1236 = vunpack.c.h.b16 %v1150
      %v1237 = vunpack.c.l.b16 %v1151
      %v1238 = vunpack.c.h.b16 %v1151
      %v1239 = vunpack.c.l.b16 %v1152
      %v1240 = vunpack.c.h.b16 %v1152
      %v1241 = vunpack.c.l.b16 %v1153
      %v1242 = vunpack.c.h.b16 %v1153
      %v1243 = vunpack.c.l.b16 %v1154
      %v1244 = vunpack.c.h.b16 %v1154
      %v1245 = vunpack.c.l.b16 %v1155
      %v1246 = vunpack.c.h.b16 %v1155
      %v1247 = vunpack.c.l.b16 %v1156
      %v1248 = vunpack.c.h.b16 %v1156
      %v1249 = vunpack.c.l.b16 %v1157
      %v1250 = vunpack.c.h.b16 %v1157
      %v1251 = vunpack.c.l.b16 %v1158
      %v1252 = vunpack.c.h.b16 %v1158
      %v1253 = vunpack.c.l.b16 %v1159
      %v1254 = vunpack.c.h.b16 %v1159
      %v1255 = vunpack.c.l.b16 %v1160
      %v1256 = vunpack.c.h.b16 %v1160
      %v1257 = vunpack.c.l.b16 %v1161
      %v1258 = vunpack.c.h.b16 %v1161
      %v1259 = vunpack.c.l.b16 %v1162
      %v1260 = vunpack.c.h.b16 %v1162
      %v1261 = vunpack.c.l.b16 %v1163
      %v1262 = vunpack.c.h.b16 %v1163
      %v1263 = vunpack.c.l.b16 %v1164
      %v1264 = vunpack.c.h.b16 %v1164
      %v1265 = vunpack.c.l.b16 %v1165
      %v1266 = vunpack.c.h.b16 %v1165
      %v1267 = vunpack.c.l.b16 %v1166
      %v1268 = vunpack.c.h.b16 %v1166
      %v1269 = vunpack.c.l.b16 %v1167
      %v1270 = vunpack.c.h.b16 %v1167
      %v1271 = vunpack.c.l.b16 %v1168
      %v1272 = vunpack.c.h.b16 %v1168
      %v1273 = vunpack.c.l.b16 %v1169
      %v1274 = vunpack.c.h.b16 %v1169
      %v1275 = vunpack.c.l.b16 %v1170
      %v1276 = vunpack.c.h.b16 %v1170
      %v1277 = vunpack.c.l.b16 %v1171
      %v1278 = vunpack.c.h.b16 %v1171
      %v1279 = vunpack.c.l.b16 %v1172
      %v1280 = vunpack.c.h.b16 %v1172
      %v1281 = vpack.c.b16 %v1219, %v1217
      %v1282 = vpack.c.b16 %v1220, %v1218
      %v1283 = vpack.c.b16 %v1223, %v1221
      %v1284 = vpack.c.b16 %v1224, %v1222
      %v1285 = vpack.c.b16 %v1227, %v1225
      %v1286 = vpack.c.b16 %v1228, %v1226
      %v1287 = vpack.c.b16 %v1231, %v1229
      %v1288 = vpack.c.b16 %v1232, %v1230
      %v1289 = vpack.c.b16 %v1235, %v1233
      %v1290 = vpack.c.b16 %v1236, %v1234
      %v1291 = vpack.c.b16 %v1239, %v1237
      %v1292 = vpack.c.b16 %v1240, %v1238
      %v1293 = vpack.c.b16 %v1243, %v1241
      %v1294 = vpack.c.b16 %v1244, %v1242
      %v1295 = vpack.c.b16 %v1247, %v1245
      %v1296 = vpack.c.b16 %v1248, %v1246
      %v1297 = vpack.c.b16 %v1251, %v1249
      %v1298 = vpack.c.b16 %v1252, %v1250
      %v1299 = vpack.c.b16 %v1255, %v1253
      %v1300 = vpack.c.b16 %v1256, %v1254
      %v1301 = vpack.c.b16 %v1259, %v1257
      %v1302 = vpack.c.b16 %v1260, %v1258
      %v1303 = vpack.c.b16 %v1263, %v1261
      %v1304 = vpack.c.b16 %v1264, %v1262
      %v1305 = vpack.c.b16 %v1267, %v1265
      %v1306 = vpack.c.b16 %v1268, %v1266
      %v1307 = vpack.c.b16 %v1271, %v1269
      %v1308 = vpack.c.b16 %v1272, %v1270
      %v1309 = vpack.c.b16 %v1275, %v1273
      %v1310 = vpack.c.b16 %v1276, %v1274
      %v1311 = vpack.c.b16 %v1279, %v1277
      %v1312 = vpack.c.b16 %v1280, %v1278
      %1345 = vmatprep.subr.bf16.mxu0 %v1296
      %1346 = vmatpush1.bf16.msra.mxu0 %v1295
      %1347 = vmatprep.subr.bf16.mxu0 %v1294
      %1348 = vmatpush1.bf16.msra.mxu0 %v1293
      %1349 = vmatprep.subr.bf16.mxu0 %v1292
      %1350 = vmatpush1.bf16.msra.mxu0 %v1291
      %1351 = vmatprep.subr.bf16.mxu0 %v1290
      %1352 = vmatpush1.bf16.msra.mxu0 %v1289
      %1353 = vmatprep.subr.bf16.mxu0 %v1288
      %1354 = vmatpush1.bf16.msra.mxu0 %v1287
      %1355 = vmatprep.subr.bf16.mxu0 %v1286
      %1356 = vmatpush1.bf16.msra.mxu0 %v1285
      %1357 = vmatprep.subr.bf16.mxu0 %v1284
      %1358 = vmatpush1.bf16.msra.mxu0 %v1283
      %1359 = vmatprep.subr.bf16.mxu0 %v1282
      %1360 = vmatpush1.bf16.msra.mxu0 %v1281
      %1361 = vmatprep.subr.bf16.mxu0 %v1312
      %1362 = vmatpush2.bf16.msra.mxu0 %v1311
      %1363 = vmatprep.subr.bf16.mxu0 %v1310
      %1364 = vmatpush2.bf16.msra.mxu0 %v1309
      %1365 = vmatprep.subr.bf16.mxu0 %v1308
      %1366 = vmatpush2.bf16.msra.mxu0 %v1307
      %1367 = vmatprep.subr.bf16.mxu0 %v1306
      %1368 = vmatpush2.bf16.msra.mxu0 %v1305
      %1369 = vmatprep.subr.bf16.mxu0 %v1304
      %1370 = vmatpush2.bf16.msra.mxu0 %v1303
      %1371 = vmatprep.subr.bf16.mxu0 %v1302
      %1372 = vmatpush2.bf16.msra.mxu0 %v1301
      %1373 = vmatprep.subr.bf16.mxu0 %v1300
      %1374 = vmatpush2.bf16.msra.mxu0 %v1299
      %1375 = vmatprep.subr.bf16.mxu0 %v1298
      %1376 = vmatpush2.bf16.msra.mxu0 %v1297
      %1377 = vmatprep.mubr.bf16.mxu0 %v1126
      %1378 = vmatmul.mubr.bf16.gmra.mxu0 %v1125
      %v1379 = vpop.f32.mrf.mxu0
      %v1380 = vadd.f32 %v1178, %v1379
      %v1381 = vpop.f32.mrf.mxu0
      %v1382 = vadd.f32 %v1182, %v1381
      %v1383 = vpop.f32.mrf.mxu0
      %v1384 = vadd.f32 %v1178, %v1383
      %v1385 = vpop.f32.mrf.mxu0
      %v1386 = vadd.f32 %v1182, %v1385
      %1387 = vmatprep.mubr.bf16.mxu0 %v1128
      %1388 = vmatmul.mubr.bf16.gmra.mxu0 %v1127
      %v1389 = vpop.f32.mrf.mxu0
      %v1390 = vadd.f32 %v1178, %v1389
      %v1391 = vpop.f32.mrf.mxu0
      %v1392 = vadd.f32 %v1182, %v1391
      %v1393 = vpop.f32.mrf.mxu0
      %v1394 = vadd.f32 %v1178, %v1393
      %v1395 = vpop.f32.mrf.mxu0
      %v1396 = vadd.f32 %v1182, %v1395
      %1397 = vmatprep.mubr.bf16.mxu0 %v1130
      %1398 = vmatmul.mubr.bf16.gmra.mxu0 %v1129
      %v1399 = vpop.f32.mrf.mxu0
      %v1400 = vadd.f32 %v1178, %v1399
      %v1401 = vpop.f32.mrf.mxu0
      %v1402 = vadd.f32 %v1182, %v1401
      %v1403 = vpop.f32.mrf.mxu0
      %v1404 = vadd.f32 %v1178, %v1403
      %v1405 = vpop.f32.mrf.mxu0
      %v1406 = vadd.f32 %v1182, %v1405
      %1407 = vmatprep.mubr.bf16.mxu0 %v1132
      %1408 = vmatmul.mubr.bf16.gmra.mxu0 %v1131
      %v1409 = vpop.f32.mrf.mxu0
      %v1410 = vadd.f32 %v1178, %v1409
      %v1411 = vpop.f32.mrf.mxu0
      %v1412 = vadd.f32 %v1182, %v1411
      %v1413 = vpop.f32.mrf.mxu0
      %v1414 = vadd.f32 %v1178, %v1413
      %v1415 = vpop.f32.mrf.mxu0
      %v1416 = vadd.f32 %v1182, %v1415
      %1417 = vmatprep.mubr.bf16.mxu0 %v1134
      %1418 = vmatmul.mubr.bf16.gmra.mxu0 %v1133
      %v1419 = vpop.f32.mrf.mxu0
      %v1420 = vadd.f32 %v1178, %v1419
      %v1421 = vpop.f32.mrf.mxu0
      %v1422 = vadd.f32 %v1182, %v1421
      %v1423 = vpop.f32.mrf.mxu0
      %v1424 = vadd.f32 %v1178, %v1423
      %v1425 = vpop.f32.mrf.mxu0
      %v1426 = vadd.f32 %v1182, %v1425
      %1427 = vmatprep.mubr.bf16.mxu0 %v1136
      %1428 = vmatmul.mubr.bf16.gmra.mxu0 %v1135
      %v1429 = vpop.f32.mrf.mxu0
      %v1430 = vadd.f32 %v1178, %v1429
      %v1431 = vpop.f32.mrf.mxu0
      %v1432 = vadd.f32 %v1182, %v1431
      %v1433 = vpop.f32.mrf.mxu0
      %v1434 = vadd.f32 %v1178, %v1433
      %v1435 = vpop.f32.mrf.mxu0
      %v1436 = vadd.f32 %v1182, %v1435
      %1437 = vmatprep.mubr.bf16.mxu0 %v1138
      %1438 = vmatmul.mubr.bf16.gmra.mxu0 %v1137
      %v1439 = vpop.f32.mrf.mxu0
      %v1440 = vadd.f32 %v1178, %v1439
      %v1441 = vpop.f32.mrf.mxu0
      %v1442 = vadd.f32 %v1182, %v1441
      %v1443 = vpop.f32.mrf.mxu0
      %v1444 = vadd.f32 %v1178, %v1443
      %v1445 = vpop.f32.mrf.mxu0
      %v1446 = vadd.f32 %v1182, %v1445
      %1447 = vmatprep.mubr.bf16.mxu0 %v1140
      %1448 = vmatmul.mubr.bf16.gmra.mxu0 %v1139
      %v1449 = vpop.f32.mrf.mxu0
      %v1450 = vadd.f32 %v1178, %v1449
      %v1451 = vpop.f32.mrf.mxu0
      %v1452 = vadd.f32 %v1182, %v1451
      %v1453 = vpop.f32.mrf.mxu0
      %v1454 = vadd.f32 %v1178, %v1453
      %v1455 = vpop.f32.mrf.mxu0
      %v1456 = vadd.f32 %v1182, %v1455
      %1457 = vdwg.mxu0
      %v1458 = vmax.f32 %v1380, 0.0
      %v1459 = vmax.f32 %v1382, 0.0
      %v1460 = vmax.f32 %v1384, 0.0
      %v1461 = vmax.f32 %v1386, 0.0
      %v1462 = vmax.f32 %v1390, 0.0
      %v1463 = vmax.f32 %v1392, 0.0
      %v1464 = vmax.f32 %v1394, 0.0
      %v1465 = vmax.f32 %v1396, 0.0
      %v1466 = vmax.f32 %v1400, 0.0
      %v1467 = vmax.f32 %v1402, 0.0
      %v1468 = vmax.f32 %v1404, 0.0
      %v1469 = vmax.f32 %v1406, 0.0
      %v1470 = vmax.f32 %v1410, 0.0
      %v1471 = vmax.f32 %v1412, 0.0
      %v1472 = vmax.f32 %v1414, 0.0
      %v1473 = vmax.f32 %v1416, 0.0
      %v1474 = vmax.f32 %v1420, 0.0
      %v1475 = vmax.f32 %v1422, 0.0
      %v1476 = vmax.f32 %v1424, 0.0
      %v1477 = vmax.f32 %v1426, 0.0
      %v1478 = vmax.f32 %v1430, 0.0
      %v1479 = vmax.f32 %v1432, 0.0
      %v1480 = vmax.f32 %v1434, 0.0
      %v1481 = vmax.f32 %v1436, 0.0
      %v1482 = vmax.f32 %v1440, 0.0
      %v1483 = vmax.f32 %v1442, 0.0
      %v1484 = vmax.f32 %v1444, 0.0
      %v1485 = vmax.f32 %v1446, 0.0
      %v1486 = vmax.f32 %v1450, 0.0
      %v1487 = vmax.f32 %v1452, 0.0
      %v1488 = vmax.f32 %v1454, 0.0
      %v1489 = vmax.f32 %v1456, 0.0
      %v1490 = vld [vmem:[%s7] sm:$0xff]
      %v1491 = vld [vmem:[%s7 + $0x8] sm:$0xff]
      %v1492 = vld [vmem:[%s7 + $0x10] sm:$0xff]
      %v1493 = vld [vmem:[%s7 + $0x18] sm:$0xff]
      %v1494 = vld [vmem:[%s7 + $0x20] sm:$0xff]
      %v1495 = vld [vmem:[%s7 + $0x28] sm:$0xff]
      %v1496 = vld [vmem:[%s7 + $0x30] sm:$0xff]
      %v1497 = vld [vmem:[%s7 + $0x38] sm:$0xff]
      %v1498 = vld [vmem:[%s7 + $0x40] sm:$0xff]
      %v1499 = vld [vmem:[%s7 + $0x48] sm:$0xff]
      %v1500 = vld [vmem:[%s7 + $0x50] sm:$0xff]
      %v1501 = vld [vmem:[%s7 + $0x58] sm:$0xff]
      %v1502 = vld [vmem:[%s7 + $0x60] sm:$0xff]
      %v1503 = vld [vmem:[%s7 + $0x68] sm:$0xff]
      %v1504 = vld [vmem:[%s7 + $0x70] sm:$0xff]
      %v1505 = vld [vmem:[%s7 + $0x78] sm:$0xff]
      %v1506 = vld [vmem:[%s7 + $0x80] sm:$0xff]
      %v1507 = vld [vmem:[%s7 + $0x88] sm:$0xff]
      %v1508 = vld [vmem:[%s7 + $0x90] sm:$0xff]
      %v1509 = vld [vmem:[%s7 + $0x98] sm:$0xff]
      %v1510 = vld [vmem:[%s7 + $0xa0] sm:$0xff]
      %v1511 = vld [vmem:[%s7 + $0xa8] sm:$0xff]
      %v1512 = vld [vmem:[%s7 + $0xb0] sm:$0xff]
      %v1513 = vld [vmem:[%s7 + $0xb8] sm:$0xff]
      %v1514 = vld [vmem:[%s7 + $0xc0] sm:$0xff]
      %v1515 = vld [vmem:[%s7 + $0xc8] sm:$0xff]
      %v1516 = vld [vmem:[%s7 + $0xd0] sm:$0xff]
      %v1517 = vld [vmem:[%s7 + $0xd8] sm:$0xff]
      %v1518 = vld [vmem:[%s7 + $0xe0] sm:$0xff]
      %v1519 = vld [vmem:[%s7 + $0xe8] sm:$0xff]
      %v1520 = vld [vmem:[%s7 + $0xf0] sm:$0xff]
      %v1521 = vld [vmem:[%s7 + $0xf8] sm:$0xff]
      %v1522 = vld [vmem:[%s8] sm:$0x1]
      %v1524 = vlaneseq
      %v1525 = vshrl.u32 %v1524, 7
      %v1526 = vsub.s32 0, %v1525
      %v1527 = vrot.slane %v1522, %v1526
      %1529 = vmatprep.subr.mxu0 0.0
      %1530 = vmatpush1.msra.mxu0 %v1505
      %1531 = vmatprep.subr.mxu0 0.0
      %1532 = vmatpush1.msra.mxu0 %v1504
      %1533 = vmatprep.subr.mxu0 0.0
      %1534 = vmatpush1.msra.mxu0 %v1503
      %1535 = vmatprep.subr.mxu0 0.0
      %1536 = vmatpush1.msra.mxu0 %v1502
      %1537 = vmatprep.subr.mxu0 0.0
      %1538 = vmatpush1.msra.mxu0 %v1501
      %1539 = vmatprep.subr.mxu0 0.0
      %1540 = vmatpush1.msra.mxu0 %v1500
      %1541 = vmatprep.subr.mxu0 0.0
      %1542 = vmatpush1.msra.mxu0 %v1499
      %1543 = vmatprep.subr.mxu0 0.0
      %1544 = vmatpush1.msra.mxu0 %v1498
      %1545 = vmatprep.subr.mxu0 0.0
      %1546 = vmatpush1.msra.mxu0 %v1497
      %1547 = vmatprep.subr.mxu0 0.0
      %1548 = vmatpush1.msra.mxu0 %v1496
      %1549 = vmatprep.subr.mxu0 0.0
      %1550 = vmatpush1.msra.mxu0 %v1495
      %1551 = vmatprep.subr.mxu0 0.0
      %1552 = vmatpush1.msra.mxu0 %v1494
      %1553 = vmatprep.subr.mxu0 0.0
      %1554 = vmatpush1.msra.mxu0 %v1493
      %1555 = vmatprep.subr.mxu0 0.0
      %1556 = vmatpush1.msra.mxu0 %v1492
      %1557 = vmatprep.subr.mxu0 0.0
      %1558 = vmatpush1.msra.mxu0 %v1491
      %1559 = vmatprep.subr.mxu0 0.0
      %1560 = vmatpush1.msra.mxu0 %v1490
      %1561 = vmatprep.subr.mxu0 0.0
      %1562 = vmatpush2.msra.mxu0 %v1521
      %1563 = vmatprep.subr.mxu0 0.0
      %1564 = vmatpush2.msra.mxu0 %v1520
      %1565 = vmatprep.subr.mxu0 0.0
      %1566 = vmatpush2.msra.mxu0 %v1519
      %1567 = vmatprep.subr.mxu0 0.0
      %1568 = vmatpush2.msra.mxu0 %v1518
      %1569 = vmatprep.subr.mxu0 0.0
      %1570 = vmatpush2.msra.mxu0 %v1517
      %1571 = vmatprep.subr.mxu0 0.0
      %1572 = vmatpush2.msra.mxu0 %v1516
      %1573 = vmatprep.subr.mxu0 0.0
      %1574 = vmatpush2.msra.mxu0 %v1515
      %1575 = vmatprep.subr.mxu0 0.0
      %1576 = vmatpush2.msra.mxu0 %v1514
      %1577 = vmatprep.subr.mxu0 0.0
      %1578 = vmatpush2.msra.mxu0 %v1513
      %1579 = vmatprep.subr.mxu0 0.0
      %1580 = vmatpush2.msra.mxu0 %v1512
      %1581 = vmatprep.subr.mxu0 0.0
      %1582 = vmatpush2.msra.mxu0 %v1511
      %1583 = vmatprep.subr.mxu0 0.0
      %1584 = vmatpush2.msra.mxu0 %v1510
      %1585 = vmatprep.subr.mxu0 0.0
      %1586 = vmatpush2.msra.mxu0 %v1509
      %1587 = vmatprep.subr.mxu0 0.0
      %1588 = vmatpush2.msra.mxu0 %v1508
      %1589 = vmatprep.subr.mxu0 0.0
      %1590 = vmatpush2.msra.mxu0 %v1507
      %1591 = vmatprep.subr.mxu0 0.0
      %1592 = vmatpush2.msra.mxu0 %v1506
      %1593 = vmatprep.mubr.f32.mxu0 %v1459
      %1594 = vmatmul.mubr.f32.gmra.mxu0 %v1458
      %v1595 = vpop.f32.mrf.mxu0
      %v1596 = vadd.f32 %v1527, %v1595
      %v1597 = vpop.f32.mrf.mxu0
      %1598 = vmatprep.mubr.f32.mxu0 %v1461
      %1599 = vmatmul.mubr.f32.gmra.mxu0 %v1460
      %v1600 = vpop.f32.mrf.mxu0
      %v1601 = vadd.f32 %v1527, %v1600
      %v1602 = vpop.f32.mrf.mxu0
      %1603 = vmatprep.mubr.f32.mxu0 %v1463
      %1604 = vmatmul.mubr.f32.gmra.mxu0 %v1462
      %v1605 = vpop.f32.mrf.mxu0
      %v1606 = vadd.f32 %v1527, %v1605
      %v1607 = vpop.f32.mrf.mxu0
      %1608 = vmatprep.mubr.f32.mxu0 %v1465
      %1609 = vmatmul.mubr.f32.gmra.mxu0 %v1464
      %v1610 = vpop.f32.mrf.mxu0
      %v1611 = vadd.f32 %v1527, %v1610
      %v1612 = vpop.f32.mrf.mxu0
      %1613 = vmatprep.mubr.f32.mxu0 %v1467
      %1614 = vmatmul.mubr.f32.gmra.mxu0 %v1466
      %v1615 = vpop.f32.mrf.mxu0
      %v1616 = vadd.f32 %v1527, %v1615
      %v1617 = vpop.f32.mrf.mxu0
      %1618 = vmatprep.mubr.f32.mxu0 %v1469
      %1619 = vmatmul.mubr.f32.gmra.mxu0 %v1468
      %v1620 = vpop.f32.mrf.mxu0
      %v1621 = vadd.f32 %v1527, %v1620
      %v1622 = vpop.f32.mrf.mxu0
      %1623 = vmatprep.mubr.f32.mxu0 %v1471
      %1624 = vmatmul.mubr.f32.gmra.mxu0 %v1470
      %v1625 = vpop.f32.mrf.mxu0
      %v1626 = vadd.f32 %v1527, %v1625
      %v1627 = vpop.f32.mrf.mxu0
      %1628 = vmatprep.mubr.f32.mxu0 %v1473
      %1629 = vmatmul.mubr.f32.gmra.mxu0 %v1472
      %v1630 = vpop.f32.mrf.mxu0
      %v1631 = vadd.f32 %v1527, %v1630
      %v1632 = vpop.f32.mrf.mxu0
      %1633 = vmatprep.mubr.f32.mxu0 %v1475
      %1634 = vmatmul.mubr.f32.gmra.mxu0 %v1474
      %v1635 = vpop.f32.mrf.mxu0
      %v1636 = vadd.f32 %v1527, %v1635
      %v1637 = vpop.f32.mrf.mxu0
      %1638 = vmatprep.mubr.f32.mxu0 %v1477
      %1639 = vmatmul.mubr.f32.gmra.mxu0 %v1476
      %v1640 = vpop.f32.mrf.mxu0
      %v1641 = vadd.f32 %v1527, %v1640
      %v1642 = vpop.f32.mrf.mxu0
      %1643 = vmatprep.mubr.f32.mxu0 %v1479
      %1644 = vmatmul.mubr.f32.gmra.mxu0 %v1478
      %v1645 = vpop.f32.mrf.mxu0
      %v1646 = vadd.f32 %v1527, %v1645
      %v1647 = vpop.f32.mrf.mxu0
      %1648 = vmatprep.mubr.f32.mxu0 %v1481
      %1649 = vmatmul.mubr.f32.gmra.mxu0 %v1480
      %v1650 = vpop.f32.mrf.mxu0
      %v1651 = vadd.f32 %v1527, %v1650
      %v1652 = vpop.f32.mrf.mxu0
      %1653 = vmatprep.mubr.f32.mxu0 %v1483
      %1654 = vmatmul.mubr.f32.gmra.mxu0 %v1482
      %v1655 = vpop.f32.mrf.mxu0
      %v1656 = vadd.f32 %v1527, %v1655
      %v1657 = vpop.f32.mrf.mxu0
      %1658 = vmatprep.mubr.f32.mxu0 %v1485
      %1659 = vmatmul.mubr.f32.gmra.mxu0 %v1484
      %v1660 = vpop.f32.mrf.mxu0
      %v1661 = vadd.f32 %v1527, %v1660
      %v1662 = vpop.f32.mrf.mxu0
      %1663 = vmatprep.mubr.f32.mxu0 %v1487
      %1664 = vmatmul.mubr.f32.gmra.mxu0 %v1486
      %v1665 = vpop.f32.mrf.mxu0
      %v1666 = vadd.f32 %v1527, %v1665
      %v1667 = vpop.f32.mrf.mxu0
      %1668 = vmatprep.mubr.f32.mxu0 %v1489
      %1669 = vmatmul.mubr.f32.gmra.mxu0 %v1488
      %v1670 = vpop.f32.mrf.mxu0
      %v1671 = vadd.f32 %v1527, %v1670
      %v1672 = vpop.f32.mrf.mxu0
      %1673 = vdwg.mxu0
      %vm1674 = vcmask 15360
      %v1675 = vsel %vm1674, %v1596, 0.0
      %1676 = vadd.xlane.f32.xlu0 %v1675
      %v1677 = vpop.xlane.xlu0 %1676
      %v1678 = vsel %vm1674, %v1601, 0.0
      %1679 = vadd.xlane.f32.xlu0 %v1678
      %v1680 = vpop.xlane.xlu0 %1679
      %v1681 = vsel %vm1674, %v1606, 0.0
      %1682 = vadd.xlane.f32.xlu0 %v1681
      %v1683 = vpop.xlane.xlu0 %1682
      %v1684 = vsel %vm1674, %v1611, 0.0
      %1685 = vadd.xlane.f32.xlu0 %v1684
      %v1686 = vpop.xlane.xlu0 %1685
      %v1687 = vsel %vm1674, %v1616, 0.0
      %1688 = vadd.xlane.f32.xlu0 %v1687
      %v1689 = vpop.xlane.xlu0 %1688
      %v1690 = vsel %vm1674, %v1621, 0.0
      %1691 = vadd.xlane.f32.xlu0 %v1690
      %v1692 = vpop.xlane.xlu0 %1691
      %v1693 = vsel %vm1674, %v1626, 0.0
      %1694 = vadd.xlane.f32.xlu0 %v1693
      %v1695 = vpop.xlane.xlu0 %1694
      %v1696 = vsel %vm1674, %v1631, 0.0
      %1697 = vadd.xlane.f32.xlu0 %v1696
      %v1698 = vpop.xlane.xlu0 %1697
      %v1699 = vsel %vm1674, %v1636, 0.0
      %1700 = vadd.xlane.f32.xlu0 %v1699
      %v1701 = vpop.xlane.xlu0 %1700
      %v1702 = vsel %vm1674, %v1641, 0.0
      %1703 = vadd.xlane.f32.xlu0 %v1702
      %v1704 = vpop.xlane.xlu0 %1703
      %v1705 = vsel %vm1674, %v1646, 0.0
      %1706 = vadd.xlane.f32.xlu0 %v1705
      %v1707 = vpop.xlane.xlu0 %1706
      %v1708 = vsel %vm1674, %v1651, 0.0
      %1709 = vadd.xlane.f32.xlu0 %v1708
      %v1710 = vpop.xlane.xlu0 %1709
      %v1711 = vsel %vm1674, %v1656, 0.0
      %1712 = vadd.xlane.f32.xlu0 %v1711
      %v1713 = vpop.xlane.xlu0 %1712
      %v1714 = vsel %vm1674, %v1661, 0.0
      %1715 = vadd.xlane.f32.xlu0 %v1714
      %v1716 = vpop.xlane.xlu0 %1715
      %v1717 = vsel %vm1674, %v1666, 0.0
      %1718 = vadd.xlane.f32.xlu0 %v1717
      %v1719 = vpop.xlane.xlu0 %1718
      %v1720 = vsel %vm1674, %v1671, 0.0
      %1721 = vadd.xlane.f32.xlu0 %v1720
      %v1722 = vpop.xlane.xlu0 %1721
      %v1723 = vrcp.pop 2.0
      %v1724 = vmul.f32 %v1677, %v1723
      %v1725 = vmul.f32 %v1680, %v1723
      %v1726 = vmul.f32 %v1683, %v1723
      %v1727 = vmul.f32 %v1686, %v1723
      %v1728 = vmul.f32 %v1689, %v1723
      %v1729 = vmul.f32 %v1692, %v1723
      %v1730 = vmul.f32 %v1695, %v1723
      %v1731 = vmul.f32 %v1698, %v1723
      %v1732 = vmul.f32 %v1701, %v1723
      %v1733 = vmul.f32 %v1704, %v1723
      %v1734 = vmul.f32 %v1707, %v1723
      %v1735 = vmul.f32 %v1710, %v1723
      %v1736 = vmul.f32 %v1713, %v1723
      %v1737 = vmul.f32 %v1716, %v1723
      %v1738 = vmul.f32 %v1719, %v1723
      %v1739 = vmul.f32 %v1722, %v1723
      %v1740 = vsub.f32 %v1596, %v1724
      %v1741 = vsub.f32 %v1601, %v1725
      %v1742 = vsub.f32 %v1606, %v1726
      %v1743 = vsub.f32 %v1611, %v1727
      %v1744 = vsub.f32 %v1616, %v1728
      %v1745 = vsub.f32 %v1621, %v1729
      %v1746 = vsub.f32 %v1626, %v1730
      %v1747 = vsub.f32 %v1631, %v1731
      %v1748 = vsub.f32 %v1636, %v1732
      %v1749 = vsub.f32 %v1641, %v1733
      %v1750 = vsub.f32 %v1646, %v1734
      %v1751 = vsub.f32 %v1651, %v1735
      %v1752 = vsub.f32 %v1656, %v1736
      %v1753 = vsub.f32 %v1661, %v1737
      %v1754 = vsub.f32 %v1666, %v1738
      %v1755 = vsub.f32 %v1671, %v1739
      %v1756 = vmul.f32 %v1740, %v1740
      %v1757 = vmul.f32 %v1741, %v1741
      %v1758 = vmul.f32 %v1742, %v1742
      %v1759 = vmul.f32 %v1743, %v1743
      %v1760 = vmul.f32 %v1744, %v1744
      %v1761 = vmul.f32 %v1745, %v1745
      %v1762 = vmul.f32 %v1746, %v1746
      %v1763 = vmul.f32 %v1747, %v1747
      %v1764 = vmul.f32 %v1748, %v1748
      %v1765 = vmul.f32 %v1749, %v1749
      %v1766 = vmul.f32 %v1750, %v1750
      %v1767 = vmul.f32 %v1751, %v1751
      %v1768 = vmul.f32 %v1752, %v1752
      %v1769 = vmul.f32 %v1753, %v1753
      %v1770 = vmul.f32 %v1754, %v1754
      %v1771 = vmul.f32 %v1755, %v1755
      %v1772 = vsel %vm1674, %v1756, 0.0
      %1773 = vadd.xlane.f32.xlu0 %v1772
      %v1774 = vpop.xlane.xlu0 %1773
      %v1775 = vsel %vm1674, %v1757, 0.0
      %1776 = vadd.xlane.f32.xlu0 %v1775
      %v1777 = vpop.xlane.xlu0 %1776
      %v1778 = vsel %vm1674, %v1758, 0.0
      %1779 = vadd.xlane.f32.xlu0 %v1778
      %v1780 = vpop.xlane.xlu0 %1779
      %v1781 = vsel %vm1674, %v1759, 0.0
      %1782 = vadd.xlane.f32.xlu0 %v1781
      %v1783 = vpop.xlane.xlu0 %1782
      %v1784 = vsel %vm1674, %v1760, 0.0
      %1785 = vadd.xlane.f32.xlu0 %v1784
      %v1786 = vpop.xlane.xlu0 %1785
      %v1787 = vsel %vm1674, %v1761, 0.0
      %1788 = vadd.xlane.f32.xlu0 %v1787
      %v1789 = vpop.xlane.xlu0 %1788
      %v1790 = vsel %vm1674, %v1762, 0.0
      %1791 = vadd.xlane.f32.xlu0 %v1790
      %v1792 = vpop.xlane.xlu0 %1791
      %v1793 = vsel %vm1674, %v1763, 0.0
      %1794 = vadd.xlane.f32.xlu0 %v1793
      %v1795 = vpop.xlane.xlu0 %1794
      %v1796 = vsel %vm1674, %v1764, 0.0
      %1797 = vadd.xlane.f32.xlu0 %v1796
      %v1798 = vpop.xlane.xlu0 %1797
      %v1799 = vsel %vm1674, %v1765, 0.0
      %1800 = vadd.xlane.f32.xlu0 %v1799
      %v1801 = vpop.xlane.xlu0 %1800
      %v1802 = vsel %vm1674, %v1766, 0.0
      %1803 = vadd.xlane.f32.xlu0 %v1802
      %v1804 = vpop.xlane.xlu0 %1803
      %v1805 = vsel %vm1674, %v1767, 0.0
      %1806 = vadd.xlane.f32.xlu0 %v1805
      %v1807 = vpop.xlane.xlu0 %1806
      %v1808 = vsel %vm1674, %v1768, 0.0
      %1809 = vadd.xlane.f32.xlu0 %v1808
      %v1810 = vpop.xlane.xlu0 %1809
      %v1811 = vsel %vm1674, %v1769, 0.0
      %1812 = vadd.xlane.f32.xlu0 %v1811
      %v1813 = vpop.xlane.xlu0 %1812
      %v1814 = vsel %vm1674, %v1770, 0.0
      %1815 = vadd.xlane.f32.xlu0 %v1814
      %v1816 = vpop.xlane.xlu0 %1815
      %v1817 = vsel %vm1674, %v1771, 0.0
      %1818 = vadd.xlane.f32.xlu0 %v1817
      %v1819 = vpop.xlane.xlu0 %1818
      %v1820 = vmul.f32 %v1774, %v1723
      %v1821 = vmul.f32 %v1777, %v1723
      %v1822 = vmul.f32 %v1780, %v1723
      %v1823 = vmul.f32 %v1783, %v1723
      %v1824 = vmul.f32 %v1786, %v1723
      %v1825 = vmul.f32 %v1789, %v1723
      %v1826 = vmul.f32 %v1792, %v1723
      %v1827 = vmul.f32 %v1795, %v1723
      %v1828 = vmul.f32 %v1798, %v1723
      %v1829 = vmul.f32 %v1801, %v1723
      %v1830 = vmul.f32 %v1804, %v1723
      %v1831 = vmul.f32 %v1807, %v1723
      %v1832 = vmul.f32 %v1810, %v1723
      %v1833 = vmul.f32 %v1813, %v1723
      %v1834 = vmul.f32 %v1816, %v1723
      %v1835 = vmul.f32 %v1819, %v1723
      %v1836 = vadd.f32 %v1820, 1e-05
      %v1837 = vadd.f32 %v1821, 1e-05
      %v1838 = vadd.f32 %v1822, 1e-05
      %v1839 = vadd.f32 %v1823, 1e-05
      %v1840 = vadd.f32 %v1824, 1e-05
      %v1841 = vadd.f32 %v1825, 1e-05
      %v1842 = vadd.f32 %v1826, 1e-05
      %v1843 = vadd.f32 %v1827, 1e-05
      %v1844 = vadd.f32 %v1828, 1e-05
      %v1845 = vadd.f32 %v1829, 1e-05
      %v1846 = vadd.f32 %v1830, 1e-05
      %v1847 = vadd.f32 %v1831, 1e-05
      %v1848 = vadd.f32 %v1832, 1e-05
      %v1849 = vadd.f32 %v1833, 1e-05
      %v1850 = vadd.f32 %v1834, 1e-05
      %v1851 = vadd.f32 %v1835, 1e-05
      %v1852 = vrsqrt.pop %v1836
      %v1853 = vrsqrt.pop %v1837
      %v1854 = vrsqrt.pop %v1838
      %v1855 = vrsqrt.pop %v1839
      %v1856 = vrsqrt.pop %v1840
      %v1857 = vrsqrt.pop %v1841
      %v1858 = vrsqrt.pop %v1842
      %v1859 = vrsqrt.pop %v1843
      %v1860 = vrsqrt.pop %v1844
      %v1861 = vrsqrt.pop %v1845
      %v1862 = vrsqrt.pop %v1846
      %v1863 = vrsqrt.pop %v1847
      %v1864 = vrsqrt.pop %v1848
      %v1865 = vrsqrt.pop %v1849
      %v1866 = vrsqrt.pop %v1850
      %v1867 = vrsqrt.pop %v1851
      %v1868 = vmul.f32 %v1740, %v1852
      %v1869 = vmul.f32 %v1741, %v1853
      %v1870 = vmul.f32 %v1742, %v1854
      %v1871 = vmul.f32 %v1743, %v1855
      %v1872 = vmul.f32 %v1744, %v1856
      %v1873 = vmul.f32 %v1745, %v1857
      %v1874 = vmul.f32 %v1746, %v1858
      %v1875 = vmul.f32 %v1747, %v1859
      %v1876 = vmul.f32 %v1748, %v1860
      %v1877 = vmul.f32 %v1749, %v1861
      %v1878 = vmul.f32 %v1750, %v1862
      %v1879 = vmul.f32 %v1751, %v1863
      %v1880 = vmul.f32 %v1752, %v1864
      %v1881 = vmul.f32 %v1753, %v1865
      %v1882 = vmul.f32 %v1754, %v1866
      %v1883 = vmul.f32 %v1755, %v1867
      %v1884 = vld [vmem:[%s9] sm:$0x1]
      %v1886 = vlaneseq
      %v1887 = vshrl.u32 %v1886, 7
      %v1888 = vsub.s32 0, %v1887
      %v1889 = vrot.slane %v1884, %v1888
      %v1891 = vmul.f32 %v1868, %v1889
      %v1892 = vmul.f32 %v1869, %v1889
      %v1893 = vmul.f32 %v1870, %v1889
      %v1894 = vmul.f32 %v1871, %v1889
      %v1895 = vmul.f32 %v1872, %v1889
      %v1896 = vmul.f32 %v1873, %v1889
      %v1897 = vmul.f32 %v1874, %v1889
      %v1898 = vmul.f32 %v1875, %v1889
      %v1899 = vmul.f32 %v1876, %v1889
      %v1900 = vmul.f32 %v1877, %v1889
      %v1901 = vmul.f32 %v1878, %v1889
      %v1902 = vmul.f32 %v1879, %v1889
      %v1903 = vmul.f32 %v1880, %v1889
      %v1904 = vmul.f32 %v1881, %v1889
      %v1905 = vmul.f32 %v1882, %v1889
      %v1906 = vmul.f32 %v1883, %v1889
      %v1907 = vld [vmem:[%s10] sm:$0x1]
      %v1909 = vlaneseq
      %v1910 = vshrl.u32 %v1909, 7
      %v1911 = vsub.s32 0, %v1910
      %v1912 = vrot.slane %v1907, %v1911
      %v1914 = vadd.f32 %v1891, %v1912
      %v1915 = vadd.f32 %v1892, %v1912
      %v1916 = vadd.f32 %v1893, %v1912
      %v1917 = vadd.f32 %v1894, %v1912
      %v1918 = vadd.f32 %v1895, %v1912
      %v1919 = vadd.f32 %v1896, %v1912
      %v1920 = vadd.f32 %v1897, %v1912
      %v1921 = vadd.f32 %v1898, %v1912
      %v1922 = vadd.f32 %v1899, %v1912
      %v1923 = vadd.f32 %v1900, %v1912
      %v1924 = vadd.f32 %v1901, %v1912
      %v1925 = vadd.f32 %v1902, %v1912
      %v1926 = vadd.f32 %v1903, %v1912
      %v1927 = vadd.f32 %v1904, %v1912
      %v1928 = vadd.f32 %v1905, %v1912
      %v1929 = vadd.f32 %v1906, %v1912
      %1930 = vst.msk [vmem:[%s388] sm:$0xff] %vm1674, %v1914
      %1931 = vst.msk [vmem:[%s388 + $0x8] sm:$0xff] %vm1674, %v1915
      %1932 = vst.msk [vmem:[%s388 + $0x10] sm:$0xff] %vm1674, %v1916
      %1933 = vst.msk [vmem:[%s388 + $0x18] sm:$0xff] %vm1674, %v1917
      %1934 = vst.msk [vmem:[%s388 + $0x20] sm:$0xff] %vm1674, %v1918
      %1935 = vst.msk [vmem:[%s388 + $0x28] sm:$0xff] %vm1674, %v1919
      %1936 = vst.msk [vmem:[%s388 + $0x30] sm:$0xff] %vm1674, %v1920
      %1937 = vst.msk [vmem:[%s388 + $0x38] sm:$0xff] %vm1674, %v1921
      %1938 = vst.msk [vmem:[%s388 + $0x40] sm:$0xff] %vm1674, %v1922
      %1939 = vst.msk [vmem:[%s388 + $0x48] sm:$0xff] %vm1674, %v1923
      %1940 = vst.msk [vmem:[%s388 + $0x50] sm:$0xff] %vm1674, %v1924
      %1941 = vst.msk [vmem:[%s388 + $0x58] sm:$0xff] %vm1674, %v1925
      %1942 = vst.msk [vmem:[%s388 + $0x60] sm:$0xff] %vm1674, %v1926
      %1943 = vst.msk [vmem:[%s388 + $0x68] sm:$0xff] %vm1674, %v1927
      %1944 = vst.msk [vmem:[%s388 + $0x70] sm:$0xff] %vm1674, %v1928
      %1945 = vst.msk [vmem:[%s388 + $0x78] sm:$0xff] %vm1674, %v1929
      %s1946 = smul.u32 16, %s22
      %p1947 = scmp.lt.s32.totalorder %s1946, 31
      %s1948 = scalar_select %p1947, %s1946, 31
      %s1949 = smul.addr %s1948, 8
      %s1950 = scalar_lea.vmem %s11, %s1949
      // Predicated region
      $region65: #{tpu_custom_call.1} parent=63 // pred_check
        %p1951 = pneg %p276
      $region66: #{tpu_custom_call.1} parent=63 // pred_check_branch
        %1953 = sbr.rel (%p1951) target = $region68
      $region67: #{tpu_custom_call.1} parent=63 // pred_region
        %s1954 = smul.u32 16, %s22
      $region68: #{tpu_custom_call.1} parent=63 // pred_fallthru
        _
    $region64: #{tpu_custom_call.1} parent=5 // pred_fallthru
      _
    %p1955 = scmp.le.s32.totalorder 2, %s17
    // Predicated region
    $region69: #{tpu_custom_call.1} parent=5 // pred_check
      %p1956 = pneg %p1955
    $region70: #{tpu_custom_call.1} parent=5 // pred_check_branch
      %1958 = sbr.rel (%p1956) target = $region72
    $region71: #{tpu_custom_call.1} parent=5 // pred_region
      %s1959 = ssub.s32 %s17, 2
      // Predicated region
      $region73: #{tpu_custom_call.1} parent=71 // pred_check
        %p1960 = pneg %p282
      $region74: #{tpu_custom_call.1} parent=71 // pred_check_branch
        %1962 = sbr.rel (%p1960) target = $region76
      $region75: #{tpu_custom_call.1} parent=71 // pred_region
        %s1963 = smul.u32 16, %s23
        %p1964 = scmp.lt.s32.totalorder %s1963, 31
        %s1965 = scalar_select %p1964, %s1963, 31
        %s1966 = smul.addr %s1965, 8
        %s1967 = scalar_lea.vmem %s11, %s1966
      $region76: #{tpu_custom_call.1} parent=71 // pred_fallthru
        _
    $region72: #{tpu_custom_call.1} parent=5 // pred_fallthru
      _
  $region6: #{tpu_custom_call.1} parent=0 // loop_footer
    %s21 = sadd.s32 1, %s17
  $region7: #{tpu_custom_call.1} parent=0 // loop_footer_branch
    %16 = sbr.rel target = $region3
  $region8: #{tpu_custom_call.1} parent=0 // loop_exit
    _

</llo_original>
